<compile_context>
chip_gen: v5e
topology: v5e:2x2
jax: 0.10.0
libtpu: 0.0.40
codegen_flags: <defaults>
</compile_context>

<pallas_src>
import jax
import jax.numpy as jnp
from jax.experimental import pallas as pl
from jax.experimental.pallas import tpu as pltpu

_MiB = 1024 * 1024


# ---------------------------------------------------------------------------
# Hardware query (generation-dependent sizing) + feature probe.
# ---------------------------------------------------------------------------
def _query_tpu():
    """VMEM capacity (bytes) and TensorCore count. Conservative defaults if the
    trace-time query is unavailable (benign fallback, not error swallowing)."""
    vmem = 64 * _MiB   # safe everywhere (v7x has 64 MiB / TC)
    cores = 1          # v5e / v6e are single-TC; 1 == "don't cap tile_m"
    try:
        info = pltpu.get_tpu_info()
        v = getattr(info, "vmem_capacity_bytes", None)
        if isinstance(v, int) and v > 0:
            vmem = v
        for name in ("num_tensorcores", "tensorcore_count", "tensorcores_per_chip",
                     "num_cores", "core_count"):
            c = getattr(info, name, None)
            if isinstance(c, int) and c > 0:
                cores = c
                break
    except Exception:
        pass
    return vmem, cores


_VMEM_CAPACITY, _NUM_CORES = _query_tpu()
# ~112 MiB on 128-MiB parts (v5e/v6e), ~56 MiB on v7x (64 MiB per TC).
_VMEM_LIMIT_BYTES = int(min(_VMEM_CAPACITY * 7 // 8, 112 * _MiB))
_VMEM_BUDGET = _VMEM_LIMIT_BYTES - 4 * _MiB   # headroom for compiler scratch


def _probe_buffered_weights():
    """One-time functional probe: does this JAX support single-buffered resident
    operands via BlockSpec(pipeline_mode=pl.Buffered(1))? A tiny known-good kernel is
    compiled once; the real kernels never run under an exception handler."""
    if not hasattr(pl, "Buffered"):
        return False
    try:
        def k(a_ref, w_ref, o_ref):
            o_ref[...] = a_ref[...] + w_ref[...]
        f = pl.pallas_call(
            k,
            out_shape=jax.ShapeDtypeStruct((8, 128), jnp.float32),
            grid=(1,),
            in_specs=[
                pl.BlockSpec((8, 128), lambda i: (0, 0)),
                pl.BlockSpec((8, 128), lambda i: (0, 0), pipeline_mode=pl.Buffered(1)),
            ],
            out_specs=pl.BlockSpec((8, 128), lambda i: (0, 0)),
        )
        jax.block_until_ready(
            f(jnp.zeros((8, 128), jnp.float32), jnp.ones((8, 128), jnp.float32)))
        return True
    except Exception:
        return False


_HAS_BUFFERED = _probe_buffered_weights()
_WEIGHT_SPEC_KW = {"pipeline_mode": pl.Buffered(1)} if _HAS_BUFFERED else {}
_WEIGHT_BUFS = 1 if _HAS_BUFFERED else 2


def _gelu_tanh(x):
    # TODO(synk): PyTorch nn.GELU() default is the exact erf-based GELU; the tanh
    # approximation is used here (max abs difference ~1e-3). Polynomial factored to
    # minimize VALU vmuls; tanh rides the EUP slot.
    x2 = x * x
    inner = 0.7978845608028654 * (x + 0.044715 * (x2 * x))
    return 0.5 * x * (1.0 + jnp.tanh(inner))


def prepare_params(params):
    """Cast projector parameters ONCE at init time: bf16 weights (MXU feed), f32 biases
    (added to the f32 accumulator). Idempotent and free if already prepared."""
    w1, b1, w2, b2 = params
    return (jnp.asarray(w1, jnp.bfloat16),
            jnp.asarray(b1, jnp.float32).reshape(1, -1),
            jnp.asarray(w2, jnp.bfloat16),
            jnp.asarray(b2, jnp.float32).reshape(1, -1))


# ---------------------------------------------------------------------------
# Kernel 1: MLP (Linear -> GELU -> Linear) over flattened rows (the hot path).
# ---------------------------------------------------------------------------
def _mlp_kernel(x_ref, w1_ref, b1_ref, w2_ref, b2_ref, o_ref):
    # bf16 operands feed the MXU at full rate; accumulate in f32; bias-add and GELU
    # happen on the f32 accumulator so accuracy is unchanged.
    x = x_ref[...].astype(jnp.bfloat16)
    h = jnp.dot(x, w1_ref[...], preferred_element_type=jnp.float32) + b1_ref[...]
    h = _gelu_tanh(h)
    o = jnp.dot(h.astype(jnp.bfloat16), w2_ref[...], preferred_element_type=jnp.float32)
    o_ref[...] = (o + b2_ref[...]).astype(o_ref.dtype)


def _mlp_kernel_ntiled(x_ref, w1_ref, b1_ref, w2_ref, b2_ref, o_ref, h_ref):
    # Large-weight variant: w2/b2/out are tiled along Dout (second grid axis). The GELU
    # hidden activation is computed once per row tile (j == 0), cached in VMEM scratch,
    # and reused for every Dout tile.
    @pl.when(pl.program_id(1) == 0)
    def _():
        x = x_ref[...].astype(jnp.bfloat16)
        h = jnp.dot(x, w1_ref[...], preferred_element_type=jnp.float32) + b1_ref[...]
        h_ref[...] = _gelu_tanh(h).astype(jnp.bfloat16)

    o = jnp.dot(h_ref[...], w2_ref[...], preferred_element_type=jnp.float32)
    o_ref[...] = (o + b2_ref[...]).astype(o_ref.dtype)


def _choose_tile_m(M, row_bytes, budget, num_cores):
    """Largest MXU-friendly row tile fitting `budget` bytes of per-row VMEM."""
    tile = max(8, int(budget // max(row_bytes, 1)))
    tile = min(tile, 1024)  # beyond ~512-1024 rows the HBM roofline is already saturated
    if num_cores > 1:
        # keep >= num_cores grid steps so the "parallel" row axis shards across TCs
        # (only worthwhile on multi-TC parts; on v5e/v6e this would just serialize).
        tile = min(tile, max(8, pl.cdiv(pl.cdiv(M, num_cores), 8) * 8))
    tile = min(tile, pl.cdiv(M, 8) * 8)   # never larger than the (8-rounded) row count
    if tile >= 128:
        tile = (tile // 128) * 128        # full MXU M-dimension granularity
    else:
        tile = max(8, (tile // 8) * 8)
    return int(tile)


def _mlp_call_simple(M, Din, H, Dout, tile_m, out_dtype):
    return pl.pallas_call(
        _mlp_kernel,
        out_shape=jax.ShapeDtypeStruct((M, Dout), out_dtype),
        grid=(pl.cdiv(M, tile_m),),
        in_specs=[
            pl.BlockSpec((tile_m, Din), lambda i: (i, 0)),
            pl.BlockSpec((Din, H), lambda i: (0, 0), **_WEIGHT_SPEC_KW),
            pl.BlockSpec((1, H), lambda i: (0, 0), **_WEIGHT_SPEC_KW),
            pl.BlockSpec((H, Dout), lambda i: (0, 0), **_WEIGHT_SPEC_KW),
            pl.BlockSpec((1, Dout), lambda i: (0, 0), **_WEIGHT_SPEC_KW),
        ],
        out_specs=pl.BlockSpec((tile_m, Dout), lambda i: (i, 0)),
        compiler_params=pltpu.CompilerParams(
            dimension_semantics=("parallel",),
            vmem_limit_bytes=_VMEM_LIMIT_BYTES),
    )


def _mlp_call_ntiled(M, Din, H, Dout, tile_m, tile_n, out_dtype):
    return pl.pallas_call(
        _mlp_kernel_ntiled,
        out_shape=jax.ShapeDtypeStruct((M, Dout), out_dtype),
        grid=(pl.cdiv(M, tile_m), pl.cdiv(Dout, tile_n)),
        in_specs=[
            pl.BlockSpec((tile_m, Din), lambda i, j: (i, 0)),
            pl.BlockSpec((Din, H), lambda i, j: (0, 0), **_WEIGHT_SPEC_KW),
            pl.BlockSpec((1, H), lambda i, j: (0, 0), **_WEIGHT_SPEC_KW),
            pl.BlockSpec((H, tile_n), lambda i, j: (0, j)),
            pl.BlockSpec((1, tile_n), lambda i, j: (0, j)),
        ],
        out_specs=pl.BlockSpec((tile_m, tile_n), lambda i, j: (i, j)),
        scratch_shapes=[pltpu.VMEM((tile_m, H), jnp.bfloat16)],
        compiler_params=pltpu.CompilerParams(
            dimension_semantics=("parallel", "arbitrary"),
            vmem_limit_bytes=_VMEM_LIMIT_BYTES),
    )


def mlp_pallas(x2d, w1, b1, w2, b2):
    """x2d: (M, Din) -> (M, Dout). Row-tiled; weights resident in VMEM.
    No jnp.pad of the activation: partial edge blocks are handled by Pallas store
    masking (row-isolated matmuls cannot contaminate valid rows)."""
    M, Din = x2d.shape
    H = w1.shape[1]
    Dout = w2.shape[1]
    w1, b1, w2, b2 = prepare_params((w1, b1, w2, b2))  # no-op if already prepared

    x_bytes = x2d.dtype.itemsize
    out_bytes = x_bytes
    w1_bytes = _WEIGHT_BUFS * (Din * H * 2 + H * 4)
    w2_full_bytes = _WEIGHT_BUFS * (H * Dout * 2 + Dout * 4)

    if w1_bytes + w2_full_bytes <= _VMEM_BUDGET // 2:
        # Weights comfortably resident: single grid axis over rows.
        per_row = 2 * Din * x_bytes + 2 * Dout * out_bytes + 6 * H  # x/out dbuf + hidden
        tile_m = _choose_tile_m(M, per_row, _VMEM_BUDGET - w1_bytes - w2_full_bytes,
                                _NUM_CORES)
        return _mlp_call_simple(M, Din, H, Dout, tile_m, x2d.dtype)(x2d, w1, b1, w2, b2)

    # Realistic InternLM projector dims on v7x (64 MiB VMEM): keep w1 resident and tile
    # w2 / bias2 / output along Dout so everything fits with headroom for the row tile.
    tile_n = min(Dout, 512) if Dout > 512 else Dout
    w2_tile_bytes = 2 * (H * tile_n * 2 + tile_n * 4)              # double-buffered tiles
    per_row = 2 * Din * x_bytes + 2 * tile_n * out_bytes + 6 * H   # + bf16 hidden scratch
    tile_m = _choose_tile_m(M, per_row, _VMEM_BUDGET - w1_bytes - w2_tile_bytes,
                            _NUM_CORES)
    return _mlp_call_ntiled(M, Din, H, Dout, tile_m, tile_n, x2d.dtype)(x2d, w1, b1, w2, b2)


# ---------------------------------------------------------------------------
# Kernel 2 (fused): time/spatial mean tokens + MLP for 4-D inputs, one launch.
#   time_token    = mean over spatial axis (dim=2)  -> (B, T, D)
#   spatial_token = mean over time axis    (dim=1)  -> (B, S, D)
#   output        = mlp(concat([time, spatial], dim=1)) -> (B, T+S, Dout)
# ---------------------------------------------------------------------------
def _fused_token_mlp_kernel(x_ref, w1_ref, b1_ref, w2_ref, b2_ref, o_ref):
    x = x_ref[...].astype(jnp.float32)                 # (T, S, D), batch dim squeezed
    tt = jnp.mean(x, axis=1)                           # (T, D)  time tokens
    st = jnp.mean(x, axis=0)                           # (S, D)  spatial tokens
    tok = jnp.concatenate([tt, st], axis=0).astype(jnp.bfloat16)   # (T+S, D)
    h = jnp.dot(tok, w1_ref[...], preferred_element_type=jnp.float32) + b1_ref[...]
    h = _gelu_tanh(h)
    o = jnp.dot(h.astype(jnp.bfloat16), w2_ref[...], preferred_element_type=jnp.float32)
    o_ref[...] = (o + b2_ref[...]).astype(o_ref.dtype)


def _fused_token_mlp_call(B, T, S, D, H, Dout, out_dtype):
    return pl.pallas_call(
        _fused_token_mlp_kernel,
        out_shape=jax.ShapeDtypeStruct((B, T + S, Dout), out_dtype),
        grid=(B,),
        in_specs=[
            pl.BlockSpec((None, T, S, D), lambda b: (b, 0, 0, 0)),
            pl.BlockSpec((D, H), lambda b: (0, 0), **_WEIGHT_SPEC_KW),
            pl.BlockSpec((1, H), lambda b: (0, 0), **_WEIGHT_SPEC_KW),
            pl.BlockSpec((H, Dout), lambda b: (0, 0), **_WEIGHT_SPEC_KW),
            pl.BlockSpec((1, Dout), lambda b: (0, 0), **_WEIGHT_SPEC_KW),
        ],
        out_specs=pl.BlockSpec((None, T + S, Dout), lambda b: (b, 0, 0)),
        compiler_params=pltpu.CompilerParams(
            dimension_semantics=("parallel",),
            vmem_limit_bytes=_VMEM_LIMIT_BYTES),
    )


# ---------------------------------------------------------------------------
# Kernel 3: standalone token means (list branch / oversized-block fallback).
# Two dense, aligned outputs — no sublane-offset partial stores.
# ---------------------------------------------------------------------------
def _token_means_kernel(x_ref, tt_ref, st_ref):
    x = x_ref[...].astype(jnp.float32)                         # (bt, T, S, D)
    tt_ref[...] = jnp.mean(x, axis=2).astype(tt_ref.dtype)     # time tokens   (bt, T, D)
    st_ref[...] = jnp.mean(x, axis=1).astype(st_ref.dtype)     # spatial tokens(bt, S, D)


def token_means_pallas(x4d, block_bytes=8 * _MiB):
    """(B, T, S, D) -> ((B, T, D), (B, S, D)). Batches several batch elements per grid
    step to amortize the ~0.35us per-step pipeline overhead."""
    B, T, S, D = x4d.shape
    per_batch = T * S * D * x4d.dtype.itemsize
    bt = max(1, min(B, block_bytes // max(per_batch, 1)))
    return pl.pallas_call(
        _token_means_kernel,
        out_shape=(jax.ShapeDtypeStruct((B, T, D), x4d.dtype),
                   jax.ShapeDtypeStruct((B, S, D), x4d.dtype)),
        grid=(pl.cdiv(B, bt),),
        in_specs=[pl.BlockSpec((bt, T, S, D), lambda b: (b, 0, 0, 0))],
        out_specs=(pl.BlockSpec((bt, T, D), lambda b: (b, 0, 0)),
                   pl.BlockSpec((bt, S, D), lambda b: (b, 0, 0))),
        compiler_params=pltpu.CompilerParams(
            dimension_semantics=("parallel",),
            vmem_limit_bytes=_VMEM_LIMIT_BYTES),
    )(x4d)


# ---------------------------------------------------------------------------
# BaseProjector.forward
# ---------------------------------------------------------------------------
def base_projector_forward(inputs, params):
    w1, b1, w2, b2 = prepare_params(params)   # no-op if params already prepared
    H, Dout = w1.shape[1], w2.shape[1]

    if isinstance(inputs, (list, tuple)):
        concat_images, concat_features4d = inputs
        D = concat_images.shape[-1]
        tt, st = token_means_pallas(concat_features4d)
        tok = jnp.concatenate([tt, st], axis=1)            # (Bf, T+S, D)
        img_rows = concat_images.reshape(-1, D)
        tok_rows = tok.reshape(-1, tok.shape[-1])
        n_img = img_rows.shape[0]
        total_rows = n_img + tok_rows.shape[0]
        if total_rows * D * img_rows.dtype.itemsize <= 8 * _MiB:
            # Small M: one MLP launch over the concatenated rows — weights DMA'd once,
            # one dispatch; the tiny row concat is negligible next to the weight traffic.
            out = mlp_pallas(jnp.concatenate([img_rows, tok_rows], axis=0),
                             w1, b1, w2, b2)
            out_images = out[:n_img]
            out_features = out[n_img:]
        else:
            # Large activations: two row-tiled launches, skipping a full-size HBM concat.
            out_images = mlp_pallas(img_rows, w1, b1, w2, b2)
            out_features = mlp_pallas(tok_rows, w1, b1, w2, b2)
        out_images = out_images.reshape(*concat_images.shape[:2], -1)
        out_features = out_features.reshape(*tok.shape[:2], -1)
        return out_images, out_features

    if inputs.ndim == 3:
        B, N, D = inputs.shape
        out = mlp_pallas(inputs.reshape(-1, D), w1, b1, w2, b2)
        return out.reshape(B, N, -1)

    if inputs.ndim == 4:
        B, T, S, D = inputs.shape
        # Fused token-means + MLP: single launch, no HBM round trip of the token tensor.
        fused_bytes = (2 * T * S * D * inputs.dtype.itemsize            # x (double-buffered)
                       + _WEIGHT_BUFS * 2 * (D * H + H * Dout)          # bf16 weights
                       + 2 * (T + S) * Dout * inputs.dtype.itemsize     # out (double-buffered)
                       + 6 * (T + S) * (H + D))                         # live intermediates
        if fused_bytes <= _VMEM_BUDGET:
            return _fused_token_mlp_call(B, T, S, D, H, Dout, inputs.dtype)(
                inputs, w1, b1, w2, b2)
        # Fallback for very large per-batch blocks: token means then row-tiled MLP.
        tt, st = token_means_pallas(inputs)
        tok = jnp.concatenate([tt, st], axis=1)
        out = mlp_pallas(tok.reshape(-1, D), w1, b1, w2, b2)
        return out.reshape(B, T + S, -1)

    raise ValueError(f"Unsupported input ndim: {inputs.ndim}")


# ---------------------------------------------------------------------------
# Pure-JAX reference (matches the kernel's bf16-operand / f32-accumulate numerics)
# ---------------------------------------------------------------------------
def _ref_mlp(x2d, w1, b1, w2, b2):
    xb = x2d.astype(jnp.bfloat16)
    h = jnp.dot(xb, w1.astype(jnp.bfloat16), preferred_element_type=jnp.float32)
    h = _gelu_tanh(h + b1.reshape(-1).astype(jnp.float32))
    o = jnp.dot(h.astype(jnp.bfloat16), w2.astype(jnp.bfloat16),
                preferred_element_type=jnp.float32)
    return (o + b2.reshape(-1).astype(jnp.float32)).astype(x2d.dtype)


def _ref_forward_4d(x, params):
    w1, b1, w2, b2 = params
    tt = jnp.mean(x, axis=2)
    st = jnp.mean(x, axis=1)
    tok = jnp.concatenate([tt, st], axis=1)
    B, NT, D = tok.shape
    return _ref_mlp(tok.reshape(-1, D), w1, b1, w2, b2).reshape(B, NT, -1)


if __name__ == "__main__":
    key = jax.random.PRNGKey(0)
    kx, ki, kf, k1, k2, k3, k4 = jax.random.split(key, 7)

    B, T, S = 2, 4, 8              # batch, time, spatial tokens
    Din, H, Dout = 256, 512, 256   # lane-dense (multiples of 128) MLP dims

    # deterministic synthetic parameters (trunc_normal_-like scale 0.02)
    w1 = 0.02 * jax.random.normal(k1, (Din, H), jnp.float32)
    b1 = 0.02 * jax.random.normal(k2, (1, H), jnp.float32)
    w2 = 0.02 * jax.random.normal(k3, (H, Dout), jnp.float32)
    b2 = 0.02 * jax.random.normal(k4, (1, Dout), jnp.float32)
    raw_params = (w1, b1, w2, b2)
    params = prepare_params(raw_params)   # cast weights/biases once, up front

    # --- 4-D branch (fused token-means + MLP) ---
    x4d = jax.random.normal(kx, (B, T, S, Din), jnp.float32)
    out4d = jax.block_until_ready(base_projector_forward(x4d, params))
    ref4d = _ref_forward_4d(x4d, raw_params)
    assert out4d.shape == (B, T + S, Dout)
    assert jnp.allclose(out4d, ref4d, atol=2e-3, rtol=2e-3), \
        float(jnp.max(jnp.abs(out4d - ref4d)))

    # --- 3-D branch ---
    x3d = jax.random.normal(ki, (B, 8, Din), jnp.float32)
    out3d = jax.block_until_ready(base_projector_forward(x3d, params))
    ref3d = _ref_mlp(x3d.reshape(-1, Din), *raw_params).reshape(B, 8, Dout)
    assert out3d.shape == (B, 8, Dout)
    assert jnp.allclose(out3d, ref3d, atol=2e-3, rtol=2e-3)

    # --- list branch ---
    concat_images = jax.random.normal(ki, (B, 6, Din), jnp.float32)
    concat_features = jax.random.normal(kf, (B, T, S, Din), jnp.float32)
    out_img, out_feat = base_projector_forward([concat_images, concat_features], params)
    jax.block_until_ready((out_img, out_feat))
    assert out_img.shape == (B, 6, Dout)
    assert out_feat.shape == (B, T + S, Dout)
    ref_img = _ref_mlp(concat_images.reshape(-1, Din), *raw_params).reshape(B, 6, Dout)
    ref_feat = _ref_forward_4d(concat_features, raw_params)
    assert jnp.allclose(out_img, ref_img, atol=2e-3, rtol=2e-3)
    assert jnp.allclose(out_feat, ref_feat, atol=2e-3, rtol=2e-3)

    print("KERNEL_OK")
</pallas_src>

<mosaic_0001>
module attributes {stable_mosaic.version = 11 : i64} {
  func.func @k(%arg0: i32, %arg1: memref<8x128xf32, #tpu.memory_space<vmem>>, %arg2: memref<8x128xf32, #tpu.memory_space<vmem>>, %arg3: memref<8x128xf32, #tpu.memory_space<vmem>>) attributes {dimension_semantics = [#tpu.dimension_semantics<arbitrary>], iteration_bounds = array<i64: 1>, scalar_prefetch = 0 : i64, scratch_operands = 0 : i64, tpu.core_type = #tpu.core_type<tc>, window_params = [{pipeline_mode = #tpu.pipeline_mode<synchronous>, transform_indices = @transform_0, window_bounds = array<i64: 8, 128>}, {pipeline_mode = #tpu.pipeline_mode<synchronous>, transform_indices = @transform_1, window_bounds = array<i64: 8, 128>}, {pipeline_mode = #tpu.pipeline_mode<synchronous>, transform_indices = @transform_2, window_bounds = array<i64: 8, 128>}]} {
    %c0 = arith.constant 0 : index
    %c0_0 = arith.constant 0 : index
    %0 = vector.load %arg1[%c0, %c0_0] : memref<8x128xf32, #tpu.memory_space<vmem>>, vector<8x128xf32>
    %c0_1 = arith.constant 0 : index
    %c0_2 = arith.constant 0 : index
    %1 = vector.load %arg2[%c0_1, %c0_2] : memref<8x128xf32, #tpu.memory_space<vmem>>, vector<8x128xf32>
    %2 = arith.addf %0, %1 : vector<8x128xf32>
    %c0_3 = arith.constant 0 : index
    %c0_4 = arith.constant 0 : index
    %3 = vector.load %arg3[%c0_3, %c0_4] : memref<8x128xf32, #tpu.memory_space<vmem>>, vector<8x128xf32>
    tpu.vector_store %arg3[%c0_3, %c0_4], %2 {strides = array<i32>} : memref<8x128xf32, #tpu.memory_space<vmem>>, vector<8x128xf32>,
    return
  }
  func.func @transform_0(%arg0: i32) -> (i32, i32) {
    %c0_i32 = arith.constant 0 : i32
    %c0_i32_0 = arith.constant 0 : i32
    %c0_i32_1 = arith.constant 0 : i32
    return %c0_i32, %c0_i32_0 : i32, i32
  }
  func.func @transform_1(%arg0: i32) -> (i32, i32) {
    %c0_i32 = arith.constant 0 : i32
    %c0_i32_0 = arith.constant 0 : i32
    %c0_i32_1 = arith.constant 0 : i32
    return %c0_i32, %c0_i32_0 : i32, i32
  }
  func.func @transform_2(%arg0: i32) -> (i32, i32) {
    %c0_i32 = arith.constant 0 : i32
    %c0_i32_0 = arith.constant 0 : i32
    %c0_i32_1 = arith.constant 0 : i32
    return %c0_i32, %c0_i32_0 : i32, i32
  }
}

module attributes {stable_mosaic.version = 11 : i64} {
  func.func @_fused_token_mlp_kernel(%arg0: i32, %arg1: memref<1x4x8x256xf32, #tpu.memory_space<vmem>>, %arg2: memref<256x512xbf16, #tpu.memory_space<vmem>>, %arg3: memref<1x512xf32, #tpu.memory_space<vmem>>, %arg4: memref<512x256xbf16, #tpu.memory_space<vmem>>, %arg5: memref<1x256xf32, #tpu.memory_space<vmem>>, %arg6: memref<1x12x256xf32, #tpu.memory_space<vmem>>) attributes {dimension_semantics = [#tpu.dimension_semantics<parallel>], iteration_bounds = array<i64: 2>, scalar_prefetch = 0 : i64, scratch_operands = 0 : i64, tpu.core_type = #tpu.core_type<tc>, window_params = [{transform_indices = @transform_0, window_bounds = array<i64: 1, 4, 8, 256>}, {pipeline_mode = #tpu.pipeline_mode<synchronous>, transform_indices = @transform_1, window_bounds = array<i64: 256, 512>}, {pipeline_mode = #tpu.pipeline_mode<synchronous>, transform_indices = @transform_2, window_bounds = array<i64: 1, 512>}, {pipeline_mode = #tpu.pipeline_mode<synchronous>, transform_indices = @transform_3, window_bounds = array<i64: 512, 256>}, {pipeline_mode = #tpu.pipeline_mode<synchronous>, transform_indices = @transform_4, window_bounds = array<i64: 1, 256>}, {transform_indices = @transform_5, window_bounds = array<i64: 1, 12, 256>}]} {
    %c0 = arith.constant 0 : index
    %c0_0 = arith.constant 0 : index
    %c0_1 = arith.constant 0 : index
    %c0_2 = arith.constant 0 : index
    %0 = vector.load %arg1[%c0, %c0_0, %c0_1, %c0_2] : memref<1x4x8x256xf32, #tpu.memory_space<vmem>>, vector<1x4x8x256xf32>
    %1 = vector.shape_cast %0 : vector<1x4x8x256xf32> to vector<4x8x256xf32>
    %cst = arith.constant dense<0.000000e+00> : vector<4x256xf32>
    %2 = vector.multi_reduction <add>, %1, %cst [1] : vector<4x8x256xf32> to vector<4x256xf32>
    %cst_3 = arith.constant 8.000000e+00 : f32
    %3 = vector.broadcast %cst_3 : f32 to vector<4x256xf32>
    %4 = arith.divf %2, %3 : vector<4x256xf32>
    %cst_4 = arith.constant dense<0.000000e+00> : vector<8x256xf32>
    %5 = vector.multi_reduction <add>, %1, %cst_4 [0] : vector<4x8x256xf32> to vector<8x256xf32>
    %cst_5 = arith.constant 4.000000e+00 : f32
    %6 = vector.broadcast %cst_5 : f32 to vector<8x256xf32>
    %7 = arith.divf %5, %6 : vector<8x256xf32>
    %8 = tpu.concatenate %4, %7 in 0 : vector<4x256xf32>, vector<8x256xf32> -> vector<12x256xf32>
    %9 = arith.truncf %8 : vector<12x256xf32> to vector<12x256xbf16>
    %c0_6 = arith.constant 0 : index
    %c0_7 = arith.constant 0 : index
    %10 = vector.load %arg2[%c0_6, %c0_7] : memref<256x512xbf16, #tpu.memory_space<vmem>>, vector<256x512xbf16>
    %cst_8 = arith.constant dense<0.000000e+00> : vector<12x512xf32>
    %11 = tpu.matmul %9, %10, %cst_8 {dimension_numbers = #tpu.dot_dimension_numbers<[1], [0], [0], [1], [0, 0, 1, 1], [], []>} : vector<12x256xbf16>, vector<256x512xbf16>, vector<12x512xf32> -> vector<12x512xf32>
    %c0_9 = arith.constant 0 : index
    %c0_10 = arith.constant 0 : index
    %12 = vector.load %arg3[%c0_9, %c0_10] : memref<1x512xf32, #tpu.memory_space<vmem>>, vector<1x512xf32>
    %13 = vector.broadcast %12 : vector<1x512xf32> to vector<12x512xf32>
    %14 = arith.addf %11, %13 : vector<12x512xf32>
    %15 = arith.mulf %14, %14 : vector<12x512xf32>
    %16 = arith.mulf %15, %14 : vector<12x512xf32>
    %cst_11 = arith.constant 4.471500e-02 : f32
    %17 = vector.broadcast %cst_11 : f32 to vector<12x512xf32>
    %18 = arith.mulf %17, %16 : vector<12x512xf32>
    %19 = arith.addf %14, %18 : vector<12x512xf32>
    %cst_12 = arith.constant 0.797884583 : f32
    %20 = vector.broadcast %cst_12 : f32 to vector<12x512xf32>
    %21 = arith.mulf %20, %19 : vector<12x512xf32>
    %cst_13 = arith.constant 5.000000e-01 : f32
    %22 = vector.broadcast %cst_13 : f32 to vector<12x512xf32>
    %23 = arith.mulf %22, %14 : vector<12x512xf32>
    %24 = math.tanh %21 : vector<12x512xf32>
    %cst_14 = arith.constant 1.000000e+00 : f32
    %25 = vector.broadcast %cst_14 : f32 to vector<12x512xf32>
    %26 = arith.addf %25, %24 : vector<12x512xf32>
    %27 = arith.mulf %23, %26 : vector<12x512xf32>
    %28 = arith.truncf %27 : vector<12x512xf32> to vector<12x512xbf16>
    %c0_15 = arith.constant 0 : index
    %c0_16 = arith.constant 0 : index
    %29 = vector.load %arg4[%c0_15, %c0_16] : memref<512x256xbf16, #tpu.memory_space<vmem>>, vector<512x256xbf16>
    %cst_17 = arith.constant dense<0.000000e+00> : vector<12x256xf32>
    %30 = tpu.matmul %28, %29, %cst_17 {dimension_numbers = #tpu.dot_dimension_numbers<[1], [0], [0], [1], [0, 0, 1, 1], [], []>} : vector<12x512xbf16>, vector<512x256xbf16>, vector<12x256xf32> -> vector<12x256xf32>
    %c0_18 = arith.constant 0 : index
    %c0_19 = arith.constant 0 : index
    %31 = vector.load %arg5[%c0_18, %c0_19] : memref<1x256xf32, #tpu.memory_space<vmem>>, vector<1x256xf32>
    %32 = vector.broadcast %31 : vector<1x256xf32> to vector<12x256xf32>
    %33 = arith.addf %30, %32 : vector<12x256xf32>
    %c0_20 = arith.constant 0 : index
    %c0_21 = arith.constant 0 : index
    %c0_22 = arith.constant 0 : index
    %34 = vector.load %arg6[%c0_20, %c0_21, %c0_22] : memref<1x12x256xf32, #tpu.memory_space<vmem>>, vector<1x12x256xf32>
    %35 = vector.shape_cast %34 : vector<1x12x256xf32> to vector<12x256xf32>
    %36 = vector.shape_cast %33 : vector<12x256xf32> to vector<1x12x256xf32>
    tpu.vector_store %arg6[%c0_20, %c0_21, %c0_22], %36 {strides = array<i32>} : memref<1x12x256xf32, #tpu.memory_space<vmem>>, vector<1x12x256xf32>,
    return
  }
  func.func @transform_0(%arg0: i32) -> (i32, i32, i32, i32) {
    %c0_i32 = arith.constant 0 : i32
    %c0_i32_0 = arith.constant 0 : i32
    %c0_i32_1 = arith.constant 0 : i32
    %c0_i32_2 = arith.constant 0 : i32
    return %arg0, %c0_i32, %c0_i32_0, %c0_i32_1 : i32, i32, i32, i32
  }
  func.func @transform_1(%arg0: i32) -> (i32, i32) {
    %c0_i32 = arith.constant 0 : i32
    %c0_i32_0 = arith.constant 0 : i32
    %c0_i32_1 = arith.constant 0 : i32
    return %c0_i32, %c0_i32_0 : i32, i32
  }
  func.func @transform_2(%arg0: i32) -> (i32, i32) {
    %c0_i32 = arith.constant 0 : i32
    %c0_i32_0 = arith.constant 0 : i32
    %c0_i32_1 = arith.constant 0 : i32
    return %c0_i32, %c0_i32_0 : i32, i32
  }
  func.func @transform_3(%arg0: i32) -> (i32, i32) {
    %c0_i32 = arith.constant 0 : i32
    %c0_i32_0 = arith.constant 0 : i32
    %c0_i32_1 = arith.constant 0 : i32
    return %c0_i32, %c0_i32_0 : i32, i32
  }
  func.func @transform_4(%arg0: i32) -> (i32, i32) {
    %c0_i32 = arith.constant 0 : i32
    %c0_i32_0 = arith.constant 0 : i32
    %c0_i32_1 = arith.constant 0 : i32
    return %c0_i32, %c0_i32_0 : i32, i32
  }
  func.func @transform_5(%arg0: i32) -> (i32, i32, i32) {
    %c0_i32 = arith.constant 0 : i32
    %c0_i32_0 = arith.constant 0 : i32
    %c0_i32_1 = arith.constant 0 : i32
    return %arg0, %c0_i32, %c0_i32_0 : i32, i32, i32
  }
}

</mosaic_0001>

<llo_original>
// kernel: tpu_custom_call.1
$region0: #{tpu_custom_call.1}
  #allocation0 [shape = 'u32[]', space=smem, size = 0x4, offset = 0x4, fixed_abs, tag = 'smem constant byte address 0x4 - core index']
  #allocation1 [shape = 'u32[72,128]{1,0:T(1,128)}', space=vmem, size = 0x9000, scoped, tag = 'internal scratch']
  %s0 = inlined_call_operand.hbm [shape: f32[8,128], index: 0, kind: input, shape index: {}]
  %s1 = inlined_call_operand.hbm [shape: f32[8,128], index: 1, kind: input, shape index: {}]
  %s2 = inlined_call_operand.hbm [shape: f32[8,128], index: 2, kind: output, shape index: {}]
  %s3 = sld [smem:[#allocation0]]
  $region26: #{tpu_custom_call.1} parent=0
    _
  %s5 = ssub.s32 1, %s3
  %s6 = scalar_select 0, %s5, %s3
  $region1: #{tpu_custom_call.1} parent=0
    #allocation2 [shape = 'u8[4096]{0}', space=vmem, size = 0x1000, scoped, tag = 'input window, operand 0, single buffered']
    #allocation3 [shape = 's32[1]{0}', space=sflag, size = 0x4, scoped, tag = 'scoped memory for tpu_custom_call.1']
    #allocation4 [shape = 's32[1]{0}', space=sflag, size = 0x4, scoped, tag = 'scoped memory for tpu_custom_call.1']
    #allocation5 [shape = 'u8[4096]{0}', space=vmem, size = 0x1000, scoped, tag = 'input window, operand 1, single buffered']
    #allocation6 [shape = 's32[1]{0}', space=sflag, size = 0x4, scoped, tag = 'scoped memory for tpu_custom_call.1']
    #allocation7 [shape = 'u8[4096]{0}', space=vmem, size = 0x1000, scoped, tag = 'output window, operand 0, single buffered']
    %7 = vsyncpa [#allocation3], 0
    %8 = vsyncpa [#allocation6], 0
    %9 = vsyncpa [#allocation4], 0
    // Predicated region
    $region2: #{tpu_custom_call.1} parent=1 // pred_check
      _
    $region3: #{tpu_custom_call.1} parent=1 // pred_check_branch
      %11 = sbr.rel (0) target = $region5
    $region4: #{tpu_custom_call.1} parent=1 // pred_region
      %13 = vsyncadd [#allocation3], 0
      %s15 = sshll.u32 %s0, 4
      %s16 = int_to_ptr.hbm [resolvable:$true] %s15
      %s17 = sshll.u32 [#allocation2], 4
      %s18 = int_to_ptr.vmem [resolvable:$true] %s17
      %20 = dma.hbm_to_vmem [thread:$0]  %s16, 128, %s18, [#allocation3]
    $region5: #{tpu_custom_call.1} parent=1 // pred_fallthru
      _
    // Predicated region
    $region6: #{tpu_custom_call.1} parent=1 // pred_check
      _
    $region7: #{tpu_custom_call.1} parent=1 // pred_check_branch
      %22 = sbr.rel (0) target = $region9
    $region8: #{tpu_custom_call.1} parent=1 // pred_region
      %24 = vsyncadd [#allocation6], 0
      %s26 = sshll.u32 %s1, 4
      %s27 = int_to_ptr.hbm [resolvable:$true] %s26
      %s28 = sshll.u32 [#allocation5], 4
      %s29 = int_to_ptr.vmem [resolvable:$true] %s28
      %31 = dma.hbm_to_vmem [thread:$0]  %s27, 128, %s29, [#allocation6]
    $region9: #{tpu_custom_call.1} parent=1 // pred_fallthru
      _
    // Predicated region
    $region10: #{tpu_custom_call.1} parent=1 // pred_check
      _
    $region11: #{tpu_custom_call.1} parent=1 // pred_check_branch
      %33 = sbr.rel (0) target = $region13
    $region12: #{tpu_custom_call.1} parent=1 // pred_region
      %35 = dma.done [#allocation3], 128
    $region13: #{tpu_custom_call.1} parent=1 // pred_fallthru
      _
    // Predicated region
    $region14: #{tpu_custom_call.1} parent=1 // pred_check
      _
    $region15: #{tpu_custom_call.1} parent=1 // pred_check_branch
      %37 = sbr.rel (0) target = $region17
    $region16: #{tpu_custom_call.1} parent=1 // pred_region
      %39 = dma.done [#allocation6], 128
    $region17: #{tpu_custom_call.1} parent=1 // pred_fallthru
      _
    %v40 = vld [vmem:[#allocation2] sm:$0xff]
    %v41 = vld [vmem:[#allocation5] sm:$0xff]
    %v42 = vadd.f32 %v40, %v41
    %43 = vst [vmem:[#allocation7] sm:$0xff] %v42
    // Predicated region
    $region18: #{tpu_custom_call.1} parent=1 // pred_check
      _
    $region19: #{tpu_custom_call.1} parent=1 // pred_check_branch
      %45 = sbr.rel (0) target = $region21
    $region20: #{tpu_custom_call.1} parent=1 // pred_region
      %47 = vsyncadd [#allocation4], 0
      %s49 = sshll.u32 [#allocation7], 4
      %s50 = int_to_ptr.vmem [resolvable:$true] %s49
      %s51 = sshll.u32 %s2, 4
      %s52 = int_to_ptr.hbm [resolvable:$true] %s51
      %54 = dma.vmem_to_hbm [thread:$0]  %s50, 128, %s52, [#allocation4]
    $region21: #{tpu_custom_call.1} parent=1 // pred_fallthru
      _
    // Predicated region
    $region22: #{tpu_custom_call.1} parent=1 // pred_check
      _
    $region23: #{tpu_custom_call.1} parent=1 // pred_check_branch
      %56 = sbr.rel (0) target = $region25
    $region24: #{tpu_custom_call.1} parent=1 // pred_region
      %58 = dma.done [#allocation4], 128
    $region25: #{tpu_custom_call.1} parent=1 // pred_fallthru
      _
    %59 = vsyncpa [#allocation3], 1
    %60 = vsyncpa [#allocation6], 1
    %61 = vsyncpa [#allocation4], 1

// kernel: tpu_custom_call.1
$region0: #{tpu_custom_call.1}
  #allocation0 [shape = 'u32[]', space=smem, size = 0x4, offset = 0x4, fixed_abs, tag = 'smem constant byte address 0x4 - core index']
  #allocation1 [shape = 'u32[72,128]{1,0:T(1,128)}', space=vmem, size = 0x9000, scoped, tag = 'internal scratch']
  %s0 = inlined_call_operand.hbm [shape: f32[2,4,8,256], index: 0, kind: input, shape index: {}]
  %s1 = inlined_call_operand.hbm [shape: bf16[256,512], index: 1, kind: input, shape index: {}]
  %s2 = inlined_call_operand.hbm [shape: f32[1,512], index: 2, kind: input, shape index: {}]
  %s3 = inlined_call_operand.hbm [shape: bf16[512,256], index: 3, kind: input, shape index: {}]
  %s4 = inlined_call_operand.vmem [shape: f32[1,256], index: 4, kind: input, shape index: {}]
  %s5 = inlined_call_operand.vmem [shape: f32[2,12,256], index: 5, kind: output, shape index: {}]
  %s6 = sld [smem:[#allocation0]]
  $region69: #{tpu_custom_call.1} parent=0
    _
  %s8 = ssub.s32 1, %s6
  %s9 = scalar_select 0, %s8, %s6
  $region1: #{tpu_custom_call.1} parent=0
    #allocation2 [shape = 'u8[65536]{0}', space=vmem, size = 0x10000, scoped, tag = 'input window, operand 0']
    #allocation3 [shape = 's32[2]{0}', space=sflag, size = 0x8, scoped, tag = 'scoped memory for tpu_custom_call.1']
    #allocation4 [shape = 'u8[262144]{0}', space=vmem, size = 0x40000, scoped, tag = 'input window, operand 1, single buffered']
    #allocation5 [shape = 's32[1]{0}', space=sflag, size = 0x4, scoped, tag = 'scoped memory for tpu_custom_call.1']
    #allocation6 [shape = 'u8[2048]{0}', space=vmem, size = 0x800, scoped, tag = 'input window, operand 2, single buffered']
    #allocation7 [shape = 'u8[262144]{0}', space=vmem, size = 0x40000, scoped, tag = 'input window, operand 3, single buffered']
    #allocation8 [shape = 's32[1]{0}', space=sflag, size = 0x4, scoped, tag = 'scoped memory for tpu_custom_call.1']
    %10 = vsyncpa [#allocation3], 0
    %s11 = scalar_lea.sflag [#allocation3], 1
    %12 = vsyncpa %s11, 0
    %13 = vsyncpa [#allocation5], 0
    %14 = vsyncpa [#allocation8], 0
    loop: start=0, step=1, limit=4
    $region2: #{tpu_custom_call.1} parent=1 // loop_pre_header
      _
    $region3: #{tpu_custom_call.1} parent=1 // loop_header
      %s16 = sphi 0, %s20
      %p17 = scmp.ge.s32.totalorder %s16, 4
      %s26 = sphi 0, %s28
      %s29 = sphi 0, %s26
      %s30 = sphi 0, %s29
      %s46 = sphi 0, %s30
      %s50 = sphi 0, %s50
      %s52 = sphi 0, %s50
      %s53 = sphi 0, %s52
      %s67 = sphi 0, %s53
      %s71 = sphi 0, %s71
      %s73 = sphi 0, %s71
      %s74 = sphi 0, %s73
      %s88 = sphi 0, %s74
      %s92 = sphi 0, %s92
      %s94 = sphi 0, %s92
      %s95 = sphi 0, %s94
      %s109 = sphi 0, %s95
      %s113 = sphi 0, %s113
      %s115 = sphi 0, %s113
      %s116 = sphi 0, %s115
      %s130 = sphi 0, %s116
      %s136 = sphi 0, %s138
      %s139 = sphi 0, %s136
      %s140 = sphi 0, %s139
      %s156 = sphi 0, %s140
    $region4: #{tpu_custom_call.1} parent=1 // loop_header_branch
      %19 = sbr.rel (%p17) target = $region8
    $region5: #{tpu_custom_call.1} parent=1 // loop_body
      %s21 = ssub.s32 %s16, 1
      %s22 = ssub.s32 %s16, 2
      %s23 = sadd.s32 %s16, 1
      %s24 = ssub.s32 %s16, %s23
      %p25 = scmp.eq.s32.totalorder %s24, 0
      %s27 = sadd.s32 %s26, 1
      %s28 = scalar_select %p25, %s26, %s27
      %p31 = pneg %p25
      %p32 = scmp.eq.s32.totalorder %s16, 1
      %p33 = por %p31, %p32
      %p34 = scmp.ne.s32.totalorder %s26, %s29
      %p35 = scmp.eq.s32.totalorder %s16, 0
      %p36 = por %p34, %p35
      %p37 = scmp.ne.s32.totalorder %s26, %s29
      %p38 = scmp.eq.s32.totalorder %s21, 1
      %p39 = por %p37, %p38
      %p40 = scmp.ne.s32.totalorder %s29, %s30
      %p41 = scmp.eq.s32.totalorder %s21, 0
      %p42 = por %p40, %p41
      %p43 = scmp.ne.s32.totalorder %s29, %s30
      %p44 = scmp.eq.s32.totalorder %s22, 1
      %p45 = por %p43, %p44
      %p47 = scmp.ne.s32.totalorder %s30, %s46
      %p48 = scmp.eq.s32.totalorder %s22, 0
      %p49 = por %p47, %p48
      %s51 = sadd.s32 %s50, 1
      %p54 = scmp.eq.s32.totalorder %s16, 1
      %p55 = scmp.ne.s32.totalorder %s50, %s52
      %p56 = scmp.eq.s32.totalorder %s16, 0
      %p57 = por %p55, %p56
      %p58 = scmp.ne.s32.totalorder %s50, %s52
      %p59 = scmp.eq.s32.totalorder %s21, 1
      %p60 = por %p58, %p59
      %p61 = scmp.ne.s32.totalorder %s52, %s53
      %p62 = scmp.eq.s32.totalorder %s21, 0
      %p63 = por %p61, %p62
      %p64 = scmp.ne.s32.totalorder %s52, %s53
      %p65 = scmp.eq.s32.totalorder %s22, 1
      %p66 = por %p64, %p65
      %p68 = scmp.ne.s32.totalorder %s53, %s67
      %p69 = scmp.eq.s32.totalorder %s22, 0
      %p70 = por %p68, %p69
      %s72 = sadd.s32 %s71, 1
      %p75 = scmp.eq.s32.totalorder %s16, 1
      %p76 = scmp.ne.s32.totalorder %s71, %s73
      %p77 = scmp.eq.s32.totalorder %s16, 0
      %p78 = por %p76, %p77
      %p79 = scmp.ne.s32.totalorder %s71, %s73
      %p80 = scmp.eq.s32.totalorder %s21, 1
      %p81 = por %p79, %p80
      %p82 = scmp.ne.s32.totalorder %s73, %s74
      %p83 = scmp.eq.s32.totalorder %s21, 0
      %p84 = por %p82, %p83
      %p85 = scmp.ne.s32.totalorder %s73, %s74
      %p86 = scmp.eq.s32.totalorder %s22, 1
      %p87 = por %p85, %p86
      %p89 = scmp.ne.s32.totalorder %s74, %s88
      %p90 = scmp.eq.s32.totalorder %s22, 0
      %p91 = por %p89, %p90
      %s93 = sadd.s32 %s92, 1
      %p96 = scmp.eq.s32.totalorder %s16, 1
      %p97 = scmp.ne.s32.totalorder %s92, %s94
      %p98 = scmp.eq.s32.totalorder %s16, 0
      %p99 = por %p97, %p98
      %p100 = scmp.ne.s32.totalorder %s92, %s94
      %p101 = scmp.eq.s32.totalorder %s21, 1
      %p102 = por %p100, %p101
      %p103 = scmp.ne.s32.totalorder %s94, %s95
      %p104 = scmp.eq.s32.totalorder %s21, 0
      %p105 = por %p103, %p104
      %p106 = scmp.ne.s32.totalorder %s94, %s95
      %p107 = scmp.eq.s32.totalorder %s22, 1
      %p108 = por %p106, %p107
      %p110 = scmp.ne.s32.totalorder %s95, %s109
      %p111 = scmp.eq.s32.totalorder %s22, 0
      %p112 = por %p110, %p111
      %s114 = sadd.s32 %s113, 1
      %p117 = scmp.eq.s32.totalorder %s16, 1
      %p118 = scmp.ne.s32.totalorder %s113, %s115
      %p119 = scmp.eq.s32.totalorder %s16, 0
      %p120 = por %p118, %p119
      %p121 = scmp.ne.s32.totalorder %s113, %s115
      %p122 = scmp.eq.s32.totalorder %s21, 1
      %p123 = por %p121, %p122
      %p124 = scmp.ne.s32.totalorder %s115, %s116
      %p125 = scmp.eq.s32.totalorder %s21, 0
      %p126 = por %p124, %p125
      %p127 = scmp.ne.s32.totalorder %s115, %s116
      %p128 = scmp.eq.s32.totalorder %s22, 1
      %p129 = por %p127, %p128
      %p131 = scmp.ne.s32.totalorder %s116, %s130
      %p132 = scmp.eq.s32.totalorder %s22, 0
      %p133 = por %p131, %p132
      %s134 = ssub.s32 %s16, %s23
      %p135 = scmp.eq.s32.totalorder %s134, 0
      %s137 = sadd.s32 %s136, 1
      %s138 = scalar_select %p135, %s136, %s137
      %p141 = pneg %p135
      %p142 = scmp.eq.s32.totalorder %s16, 1
      %p143 = por %p141, %p142
      %p144 = scmp.ne.s32.totalorder %s136, %s139
      %p145 = scmp.eq.s32.totalorder %s16, 0
      %p146 = por %p144, %p145
      %p147 = scmp.ne.s32.totalorder %s136, %s139
      %p148 = scmp.eq.s32.totalorder %s21, 1
      %p149 = por %p147, %p148
      %p150 = scmp.ne.s32.totalorder %s139, %s140
      %p151 = scmp.eq.s32.totalorder %s21, 0
      %p152 = por %p150, %p151
      %p153 = scmp.ne.s32.totalorder %s139, %s140
      %p154 = scmp.eq.s32.totalorder %s22, 1
      %p155 = por %p153, %p154
      %p157 = scmp.ne.s32.totalorder %s140, %s156
      %p158 = scmp.eq.s32.totalorder %s22, 0
      %p159 = por %p157, %p158
      %p160 = scmp.le.s32.totalorder 1, %s16
      %p161 = scmp.lt.s32.totalorder %s16, 3
      %p162 = pnand %p160, %p161
      %p163 = pneg %p162
      // Predicated region
      $region9: #{tpu_custom_call.1} parent=5 // pred_check
        _
      $region10: #{tpu_custom_call.1} parent=5 // pred_check_branch
        %165 = sbr.rel (%p162) target = $region12
      $region11: #{tpu_custom_call.1} parent=5 // pred_region
        %s166 = ssub.s32 %s16, 1
        // Predicated region
        $region13: #{tpu_custom_call.1} parent=11 // pred_check
          %p167 = pneg %p63
        $region14: #{tpu_custom_call.1} parent=11 // pred_check_branch
          %169 = sbr.rel (%p167) target = $region16
        $region15: #{tpu_custom_call.1} parent=11 // pred_region
          %171 = vsyncadd [#allocation5], 0
          %s172 = sshll.u32 %s1, 4
          %s173 = int_to_ptr.hbm [resolvable:$true] %s172
          %s174 = sshll.u32 [#allocation4], 4
          %s175 = int_to_ptr.vmem [resolvable:$true] %s174
          %180 = dma.hbm_to_vmem [thread:$0]  %s173, 8192, %s175, [#allocation5], 256, 256, 16
        $region16: #{tpu_custom_call.1} parent=11 // pred_fallthru
          _
        // Predicated region
        $region17: #{tpu_custom_call.1} parent=11 // pred_check
          %p181 = pneg %p84
        $region18: #{tpu_custom_call.1} parent=11 // pred_check_branch
          %183 = sbr.rel (%p181) target = $region20
        $region19: #{tpu_custom_call.1} parent=11 // pred_region
          %185 = vsyncadd [#allocation5], 0
          %s187 = sshll.u32 %s2, 4
          %s188 = int_to_ptr.hbm [resolvable:$true] %s187
          %s189 = sshll.u32 [#allocation6], 4
          %s190 = int_to_ptr.vmem [resolvable:$true] %s189
          %192 = dma.hbm_to_vmem [thread:$0]  %s188, 64, %s190, [#allocation5]
        $region20: #{tpu_custom_call.1} parent=11 // pred_fallthru
          _
        // Predicated region
        $region21: #{tpu_custom_call.1} parent=11 // pred_check
          %p193 = pneg %p105
        $region22: #{tpu_custom_call.1} parent=11 // pred_check_branch
          %195 = sbr.rel (%p193) target = $region24
        $region23: #{tpu_custom_call.1} parent=11 // pred_region
          %197 = vsyncadd [#allocation8], 0
          %s198 = sshll.u32 %s3, 4
          %s199 = int_to_ptr.hbm [resolvable:$true] %s198
          %s200 = sshll.u32 [#allocation7], 4
          %s201 = int_to_ptr.vmem [resolvable:$true] %s200
          %206 = dma.hbm_to_vmem [thread:$0]  %s199, 8192, %s201, [#allocation8], 128, 128, 8
        $region24: #{tpu_custom_call.1} parent=11 // pred_fallthru
          _
        // Predicated region
        $region25: #{tpu_custom_call.1} parent=11 // pred_check
          %p207 = pneg %p126
        $region26: #{tpu_custom_call.1} parent=11 // pred_check_branch
          %209 = sbr.rel (%p207) target = $region28
        $region27: #{tpu_custom_call.1} parent=11 // pred_region
          _
        $region28: #{tpu_custom_call.1} parent=11 // pred_fallthru
          _
      $region12: #{tpu_custom_call.1} parent=5 // pred_fallthru
        _
      %p210 = scmp.lt.s32.totalorder %s16, 2
      // Predicated region
      $region29: #{tpu_custom_call.1} parent=5 // pred_check
        %p211 = pneg %p210
      $region30: #{tpu_custom_call.1} parent=5 // pred_check_branch
        %213 = sbr.rel (%p211) target = $region32
      $region31: #{tpu_custom_call.1} parent=5 // pred_region
        // Predicated region
        $region33: #{tpu_custom_call.1} parent=31 // pred_check
          %p214 = pneg %p36
        $region34: #{tpu_custom_call.1} parent=31 // pred_check_branch
          %216 = sbr.rel (%p214) target = $region36
        $region35: #{tpu_custom_call.1} parent=31 // pred_region
          %s217 = sand.u32 %s26, 1
          %s218 = scalar_lea.sflag [#allocation3], %s217
          %s219 = sand.u32 %s26, 1
          %s220 = smul.addr %s219, 64
          %s221 = scalar_lea.vmem [#allocation2], %s220
          %223 = vsyncadd %s218, 0
          %s224 = smul.addr %s16, 8
          %s225 = smul.addr %s224, 8
          %s226 = scalar_lea.hbm %s0, %s225
          %s227 = sshll.u32 %s226, 4
          %s228 = int_to_ptr.hbm [resolvable:$true] %s227
          %s229 = sshll.u32 %s221, 4
          %s230 = int_to_ptr.vmem [resolvable:$true] %s229
          %235 = dma.hbm_to_vmem [thread:$0]  %s228, 1024, %s230, %s218, 256, 256, 16
        $region36: #{tpu_custom_call.1} parent=31 // pred_fallthru
          _
      $region32: #{tpu_custom_call.1} parent=5 // pred_fallthru
        _
      %p236 = scmp.le.s32.totalorder 1, %s16
      %p237 = scmp.lt.s32.totalorder %s16, 3
      %p238 = pnand %p236, %p237
      %p239 = pneg %p238
      // Predicated region
      $region37: #{tpu_custom_call.1} parent=5 // pred_check
        _
      $region38: #{tpu_custom_call.1} parent=5 // pred_check_branch
        %241 = sbr.rel (%p238) target = $region40
      $region39: #{tpu_custom_call.1} parent=5 // pred_region
        %s242 = ssub.s32 %s16, 1
        %s243 = sand.u32 %s29, 1
        %s244 = scalar_lea.sflag [#allocation3], %s243
        %s245 = sand.u32 %s29, 1
        %s246 = smul.addr %s245, 64
        %s247 = scalar_lea.vmem [#allocation2], %s246
        // Predicated region
        $region41: #{tpu_custom_call.1} parent=39 // pred_check
          %p248 = pneg %p42
        $region42: #{tpu_custom_call.1} parent=39 // pred_check_branch
          %250 = sbr.rel (%p248) target = $region44
        $region43: #{tpu_custom_call.1} parent=39 // pred_region
          %252 = dma.done %s244, 1024
        $region44: #{tpu_custom_call.1} parent=39 // pred_fallthru
          _
        // Predicated region
        $region45: #{tpu_custom_call.1} parent=39 // pred_check
          %p253 = pneg %p63
        $region46: #{tpu_custom_call.1} parent=39 // pred_check_branch
          %255 = sbr.rel (%p253) target = $region48
        $region47: #{tpu_custom_call.1} parent=39 // pred_region
          %257 = dma.done [#allocation5], 8192
        $region48: #{tpu_custom_call.1} parent=39 // pred_fallthru
          _
        // Predicated region
        $region49: #{tpu_custom_call.1} parent=39 // pred_check
          %p258 = pneg %p84
        $region50: #{tpu_custom_call.1} parent=39 // pred_check_branch
          %260 = sbr.rel (%p258) target = $region52
        $region51: #{tpu_custom_call.1} parent=39 // pred_region
          %262 = dma.done [#allocation5], 64
        $region52: #{tpu_custom_call.1} parent=39 // pred_fallthru
          _
        // Predicated region
        $region53: #{tpu_custom_call.1} parent=39 // pred_check
          %p263 = pneg %p105
        $region54: #{tpu_custom_call.1} parent=39 // pred_check_branch
          %265 = sbr.rel (%p263) target = $region56
        $region55: #{tpu_custom_call.1} parent=39 // pred_region
          %267 = dma.done [#allocation8], 8192
        $region56: #{tpu_custom_call.1} parent=39 // pred_fallthru
          _
        %s268 = sand.u32 %s29, 1
        %s269 = scalar_lea.sflag [#allocation3], %s268
        %s270 = sand.u32 %s29, 1
        %s271 = smul.addr %s270, 64
        %s272 = scalar_lea.vmem [#allocation2], %s271
        %p273 = pneg %p42
        %p274 = pneg %p39
        %p275 = pneg %p63
        %p276 = pneg %p60
        %p277 = pneg %p84
        %p278 = pneg %p81
        %p279 = pneg %p105
        %p280 = pneg %p102
        %p281 = pneg %p126
        %p282 = pneg %p123
        %p283 = pneg %p152
        %p284 = pneg %p149
        %p285 = scmp.lt.s32.totalorder %s21, 1
        %s286 = scalar_select %p285, %s21, 1
        %s287 = smul.addr %s286, 4
        %s288 = smul.addr %s287, 8
        %s289 = scalar_lea.vmem %s5, %s288
        %p290 = scmp.lt.s32.totalorder %s21, 1
        %s291 = scalar_select %p290, %s21, 1
        %s292 = smul.addr %s291, 4
        %s293 = smul.addr %s292, 8
        %s294 = scalar_lea.vmem %s5, %s293
        %v295 = vld [vmem:[%s247] sm:$0xff]
        %v296 = vld [vmem:[%s247 + $0x8] sm:$0xff]
        %v297 = vld [vmem:[%s247 + $0x10] sm:$0xff]
        %v298 = vld [vmem:[%s247 + $0x18] sm:$0xff]
        %v299 = vld [vmem:[%s247 + $0x20] sm:$0xff]
        %v300 = vld [vmem:[%s247 + $0x28] sm:$0xff]
        %v301 = vld [vmem:[%s247 + $0x30] sm:$0xff]
        %v302 = vld [vmem:[%s247 + $0x38] sm:$0xff]
        %v303 = vrot.slane %v295, 4
        %v304 = vadd.f32 %v295, %v303
        %v305 = vrot.slane %v304, 2
        %v306 = vadd.f32 %v304, %v305
        %v307 = vrot.slane %v306, 1
        %v308 = vadd.f32 %v306, %v307
        %v309 = vrot.slane %v296, 4
        %v310 = vadd.f32 %v296, %v309
        %v311 = vrot.slane %v310, 2
        %v312 = vadd.f32 %v310, %v311
        %v313 = vrot.slane %v312, 1
        %v314 = vadd.f32 %v312, %v313
        %v315 = vrot.slane %v297, 4
        %v316 = vadd.f32 %v297, %v315
        %v317 = vrot.slane %v316, 2
        %v318 = vadd.f32 %v316, %v317
        %v319 = vrot.slane %v318, 1
        %v320 = vadd.f32 %v318, %v319
        %v321 = vrot.slane %v298, 4
        %v322 = vadd.f32 %v298, %v321
        %v323 = vrot.slane %v322, 2
        %v324 = vadd.f32 %v322, %v323
        %v325 = vrot.slane %v324, 1
        %v326 = vadd.f32 %v324, %v325
        %v327 = vrot.slane %v299, 4
        %v328 = vadd.f32 %v299, %v327
        %v329 = vrot.slane %v328, 2
        %v330 = vadd.f32 %v328, %v329
        %v331 = vrot.slane %v330, 1
        %v332 = vadd.f32 %v330, %v331
        %v333 = vrot.slane %v300, 4
        %v334 = vadd.f32 %v300, %v333
        %v335 = vrot.slane %v334, 2
        %v336 = vadd.f32 %v334, %v335
        %v337 = vrot.slane %v336, 1
        %v338 = vadd.f32 %v336, %v337
        %v339 = vrot.slane %v301, 4
        %v340 = vadd.f32 %v301, %v339
        %v341 = vrot.slane %v340, 2
        %v342 = vadd.f32 %v340, %v341
        %v343 = vrot.slane %v342, 1
        %v344 = vadd.f32 %v342, %v343
        %v345 = vrot.slane %v302, 4
        %v346 = vadd.f32 %v302, %v345
        %v347 = vrot.slane %v346, 2
        %v348 = vadd.f32 %v346, %v347
        %v349 = vrot.slane %v348, 1
        %v350 = vadd.f32 %v348, %v349
        %v351 = vrcp.pop 8.0
        %v352 = vmul.f32 8.0, %v351
        %v353 = vsub.f32 1.0, %v352
        %v354 = vmul.f32 %v351, %v353
        %v355 = vadd.f32 %v351, %v354
        %vm356 = vweird.f32 %v351
        %v357 = vsel %vm356, %v351, %v355
        %v358 = vmul.f32 %v308, %v357
        %v359 = vmul.f32 %v314, %v357
        %v360 = vmul.f32 %v320, %v357
        %v361 = vmul.f32 %v326, %v357
        %v362 = vmul.f32 %v332, %v357
        %v363 = vmul.f32 %v338, %v357
        %v364 = vmul.f32 %v344, %v357
        %v365 = vmul.f32 %v350, %v357
        %v366 = vadd.f32 %v295, %v297
        %v367 = vadd.f32 %v366, %v299
        %v368 = vadd.f32 %v367, %v301
        %v369 = vadd.f32 %v296, %v298
        %v370 = vadd.f32 %v369, %v300
        %v371 = vadd.f32 %v370, %v302
        %v372 = vrcp.pop 4.0
        %v373 = vmul.f32 4.0, %v372
        %v374 = vsub.f32 1.0, %v373
        %v375 = vmul.f32 %v372, %v374
        %v376 = vadd.f32 %v372, %v375
        %vm377 = vweird.f32 %v372
        %v378 = vsel %vm377, %v372, %v376
        %v379 = vmul.f32 %v368, %v378
        %v380 = vmul.f32 %v371, %v378
        %vm389 = vcmask 1041409
        %v390 = vsel %vm389, %v360, %v358
        %vm391 = vcmask 1042434
        %v392 = vsel %vm391, %v362, %v390
        %vm393 = vcmask 1043459
        %v394 = vsel %vm393, %v364, %v392
        %v395 = vsel %vm389, %v361, %v359
        %v396 = vsel %vm391, %v363, %v395
        %v397 = vsel %vm393, %v365, %v396
        %v402 = vrot.slane %v379, 4
        %v403 = vrot.slane %v380, 4
        %vm406 = vcmask 1043456
        %v407 = vsel %vm406, %v394, %v402
        %v408 = vsel %vm406, %v397, %v403
        %v409 = vpack.c.bf16 %v402, %v407
        %v410 = vpack.c.bf16 %v403, %v408
        %v411 = vld [vmem:[#allocation4] sm:$0xff]
        %v412 = vld [vmem:[#allocation4 + $0x8] sm:$0xff]
        %v413 = vld [vmem:[#allocation4 + $0x10] sm:$0xff]
        %v414 = vld [vmem:[#allocation4 + $0x18] sm:$0xff]
        %v415 = vld [vmem:[#allocation4 + $0x20] sm:$0xff]
        %v416 = vld [vmem:[#allocation4 + $0x28] sm:$0xff]
        %v417 = vld [vmem:[#allocation4 + $0x30] sm:$0xff]
        %v418 = vld [vmem:[#allocation4 + $0x38] sm:$0xff]
        %v419 = vld [vmem:[#allocation4 + $0x40] sm:$0xff]
        %v420 = vld [vmem:[#allocation4 + $0x48] sm:$0xff]
        %v421 = vld [vmem:[#allocation4 + $0x50] sm:$0xff]
        %v422 = vld [vmem:[#allocation4 + $0x58] sm:$0xff]
        %v423 = vld [vmem:[#allocation4 + $0x60] sm:$0xff]
        %v424 = vld [vmem:[#allocation4 + $0x68] sm:$0xff]
        %v425 = vld [vmem:[#allocation4 + $0x70] sm:$0xff]
        %v426 = vld [vmem:[#allocation4 + $0x78] sm:$0xff]
        %v427 = vld [vmem:[#allocation4 + $0x80] sm:$0xff]
        %v428 = vld [vmem:[#allocation4 + $0x88] sm:$0xff]
        %v429 = vld [vmem:[#allocation4 + $0x90] sm:$0xff]
        %v430 = vld [vmem:[#allocation4 + $0x98] sm:$0xff]
        %v431 = vld [vmem:[#allocation4 + $0xa0] sm:$0xff]
        %v432 = vld [vmem:[#allocation4 + $0xa8] sm:$0xff]
        %v433 = vld [vmem:[#allocation4 + $0xb0] sm:$0xff]
        %v434 = vld [vmem:[#allocation4 + $0xb8] sm:$0xff]
        %v435 = vld [vmem:[#allocation4 + $0xc0] sm:$0xff]
        %v436 = vld [vmem:[#allocation4 + $0xc8] sm:$0xff]
        %v437 = vld [vmem:[#allocation4 + $0xd0] sm:$0xff]
        %v438 = vld [vmem:[#allocation4 + $0xd8] sm:$0xff]
        %v439 = vld [vmem:[#allocation4 + $0xe0] sm:$0xff]
        %v440 = vld [vmem:[#allocation4 + $0xe8] sm:$0xff]
        %v441 = vld [vmem:[#allocation4 + $0xf0] sm:$0xff]
        %v442 = vld [vmem:[#allocation4 + $0xf8] sm:$0xff]
        %v443 = vld [vmem:[#allocation4 + $0x100] sm:$0xff]
        %v444 = vld [vmem:[#allocation4 + $0x108] sm:$0xff]
        %v445 = vld [vmem:[#allocation4 + $0x110] sm:$0xff]
        %v446 = vld [vmem:[#allocation4 + $0x118] sm:$0xff]
        %v447 = vld [vmem:[#allocation4 + $0x120] sm:$0xff]
        %v448 = vld [vmem:[#allocation4 + $0x128] sm:$0xff]
        %v449 = vld [vmem:[#allocation4 + $0x130] sm:$0xff]
        %v450 = vld [vmem:[#allocation4 + $0x138] sm:$0xff]
        %v451 = vld [vmem:[#allocation4 + $0x140] sm:$0xff]
        %v452 = vld [vmem:[#allocation4 + $0x148] sm:$0xff]
        %v453 = vld [vmem:[#allocation4 + $0x150] sm:$0xff]
        %v454 = vld [vmem:[#allocation4 + $0x158] sm:$0xff]
        %v455 = vld [vmem:[#allocation4 + $0x160] sm:$0xff]
        %v456 = vld [vmem:[#allocation4 + $0x168] sm:$0xff]
        %v457 = vld [vmem:[#allocation4 + $0x170] sm:$0xff]
        %v458 = vld [vmem:[#allocation4 + $0x178] sm:$0xff]
        %v459 = vld [vmem:[#allocation4 + $0x180] sm:$0xff]
        %v460 = vld [vmem:[#allocation4 + $0x188] sm:$0xff]
        %v461 = vld [vmem:[#allocation4 + $0x190] sm:$0xff]
        %v462 = vld [vmem:[#allocation4 + $0x198] sm:$0xff]
        %v463 = vld [vmem:[#allocation4 + $0x1a0] sm:$0xff]
        %v464 = vld [vmem:[#allocation4 + $0x1a8] sm:$0xff]
        %v465 = vld [vmem:[#allocation4 + $0x1b0] sm:$0xff]
        %v466 = vld [vmem:[#allocation4 + $0x1b8] sm:$0xff]
        %v467 = vld [vmem:[#allocation4 + $0x1c0] sm:$0xff]
        %v468 = vld [vmem:[#allocation4 + $0x1c8] sm:$0xff]
        %v469 = vld [vmem:[#allocation4 + $0x1d0] sm:$0xff]
        %v470 = vld [vmem:[#allocation4 + $0x1d8] sm:$0xff]
        %v471 = vld [vmem:[#allocation4 + $0x1e0] sm:$0xff]
        %v472 = vld [vmem:[#allocation4 + $0x1e8] sm:$0xff]
        %v473 = vld [vmem:[#allocation4 + $0x1f0] sm:$0xff]
        %v474 = vld [vmem:[#allocation4 + $0x1f8] sm:$0xff]
        %v475 = vld [vmem:[#allocation6] sm:$0xf]
        %v477 = vperm.slane %v475, 0
        %v478 = vperm.slane %v475, 1
        %v479 = vperm.slane %v475, 2
        %v480 = vperm.slane %v475, 3
        %v549 = vunpack.c.l.b16 %v411
        %v550 = vunpack.c.h.b16 %v411
        %v551 = vunpack.c.l.b16 %v412
        %v552 = vunpack.c.h.b16 %v412
        %v553 = vunpack.c.l.b16 %v413
        %v554 = vunpack.c.h.b16 %v413
        %v555 = vunpack.c.l.b16 %v414
        %v556 = vunpack.c.h.b16 %v414
        %v557 = vunpack.c.l.b16 %v415
        %v558 = vunpack.c.h.b16 %v415
        %v559 = vunpack.c.l.b16 %v416
        %v560 = vunpack.c.h.b16 %v416
        %v561 = vunpack.c.l.b16 %v417
        %v562 = vunpack.c.h.b16 %v417
        %v563 = vunpack.c.l.b16 %v418
        %v564 = vunpack.c.h.b16 %v418
        %v565 = vunpack.c.l.b16 %v419
        %v566 = vunpack.c.h.b16 %v419
        %v567 = vunpack.c.l.b16 %v420
        %v568 = vunpack.c.h.b16 %v420
        %v569 = vunpack.c.l.b16 %v421
        %v570 = vunpack.c.h.b16 %v421
        %v571 = vunpack.c.l.b16 %v422
        %v572 = vunpack.c.h.b16 %v422
        %v573 = vunpack.c.l.b16 %v423
        %v574 = vunpack.c.h.b16 %v423
        %v575 = vunpack.c.l.b16 %v424
        %v576 = vunpack.c.h.b16 %v424
        %v577 = vunpack.c.l.b16 %v425
        %v578 = vunpack.c.h.b16 %v425
        %v579 = vunpack.c.l.b16 %v426
        %v580 = vunpack.c.h.b16 %v426
        %v581 = vunpack.c.l.b16 %v427
        %v582 = vunpack.c.h.b16 %v427
        %v583 = vunpack.c.l.b16 %v428
        %v584 = vunpack.c.h.b16 %v428
        %v585 = vunpack.c.l.b16 %v429
        %v586 = vunpack.c.h.b16 %v429
        %v587 = vunpack.c.l.b16 %v430
        %v588 = vunpack.c.h.b16 %v430
        %v589 = vunpack.c.l.b16 %v431
        %v590 = vunpack.c.h.b16 %v431
        %v591 = vunpack.c.l.b16 %v432
        %v592 = vunpack.c.h.b16 %v432
        %v593 = vunpack.c.l.b16 %v433
        %v594 = vunpack.c.h.b16 %v433
        %v595 = vunpack.c.l.b16 %v434
        %v596 = vunpack.c.h.b16 %v434
        %v597 = vunpack.c.l.b16 %v435
        %v598 = vunpack.c.h.b16 %v435
        %v599 = vunpack.c.l.b16 %v436
        %v600 = vunpack.c.h.b16 %v436
        %v601 = vunpack.c.l.b16 %v437
        %v602 = vunpack.c.h.b16 %v437
        %v603 = vunpack.c.l.b16 %v438
        %v604 = vunpack.c.h.b16 %v438
        %v605 = vunpack.c.l.b16 %v439
        %v606 = vunpack.c.h.b16 %v439
        %v607 = vunpack.c.l.b16 %v440
        %v608 = vunpack.c.h.b16 %v440
        %v609 = vunpack.c.l.b16 %v441
        %v610 = vunpack.c.h.b16 %v441
        %v611 = vunpack.c.l.b16 %v442
        %v612 = vunpack.c.h.b16 %v442
        %v613 = vunpack.c.l.b16 %v443
        %v614 = vunpack.c.h.b16 %v443
        %v615 = vunpack.c.l.b16 %v444
        %v616 = vunpack.c.h.b16 %v444
        %v617 = vunpack.c.l.b16 %v445
        %v618 = vunpack.c.h.b16 %v445
        %v619 = vunpack.c.l.b16 %v446
        %v620 = vunpack.c.h.b16 %v446
        %v621 = vunpack.c.l.b16 %v447
        %v622 = vunpack.c.h.b16 %v447
        %v623 = vunpack.c.l.b16 %v448
        %v624 = vunpack.c.h.b16 %v448
        %v625 = vunpack.c.l.b16 %v449
        %v626 = vunpack.c.h.b16 %v449
        %v627 = vunpack.c.l.b16 %v450
        %v628 = vunpack.c.h.b16 %v450
        %v629 = vunpack.c.l.b16 %v451
        %v630 = vunpack.c.h.b16 %v451
        %v631 = vunpack.c.l.b16 %v452
        %v632 = vunpack.c.h.b16 %v452
        %v633 = vunpack.c.l.b16 %v453
        %v634 = vunpack.c.h.b16 %v453
        %v635 = vunpack.c.l.b16 %v454
        %v636 = vunpack.c.h.b16 %v454
        %v637 = vunpack.c.l.b16 %v455
        %v638 = vunpack.c.h.b16 %v455
        %v639 = vunpack.c.l.b16 %v456
        %v640 = vunpack.c.h.b16 %v456
        %v641 = vunpack.c.l.b16 %v457
        %v642 = vunpack.c.h.b16 %v457
        %v643 = vunpack.c.l.b16 %v458
        %v644 = vunpack.c.h.b16 %v458
        %v645 = vunpack.c.l.b16 %v459
        %v646 = vunpack.c.h.b16 %v459
        %v647 = vunpack.c.l.b16 %v460
        %v648 = vunpack.c.h.b16 %v460
        %v649 = vunpack.c.l.b16 %v461
        %v650 = vunpack.c.h.b16 %v461
        %v651 = vunpack.c.l.b16 %v462
        %v652 = vunpack.c.h.b16 %v462
        %v653 = vunpack.c.l.b16 %v463
        %v654 = vunpack.c.h.b16 %v463
        %v655 = vunpack.c.l.b16 %v464
        %v656 = vunpack.c.h.b16 %v464
        %v657 = vunpack.c.l.b16 %v465
        %v658 = vunpack.c.h.b16 %v465
        %v659 = vunpack.c.l.b16 %v466
        %v660 = vunpack.c.h.b16 %v466
        %v661 = vunpack.c.l.b16 %v467
        %v662 = vunpack.c.h.b16 %v467
        %v663 = vunpack.c.l.b16 %v468
        %v664 = vunpack.c.h.b16 %v468
        %v665 = vunpack.c.l.b16 %v469
        %v666 = vunpack.c.h.b16 %v469
        %v667 = vunpack.c.l.b16 %v470
        %v668 = vunpack.c.h.b16 %v470
        %v669 = vunpack.c.l.b16 %v471
        %v670 = vunpack.c.h.b16 %v471
        %v671 = vunpack.c.l.b16 %v472
        %v672 = vunpack.c.h.b16 %v472
        %v673 = vunpack.c.l.b16 %v473
        %v674 = vunpack.c.h.b16 %v473
        %v675 = vunpack.c.l.b16 %v474
        %v676 = vunpack.c.h.b16 %v474
        %v677 = vpack.c.b16 %v553, %v549
        %v678 = vpack.c.b16 %v554, %v550
        %v679 = vpack.c.b16 %v555, %v551
        %v680 = vpack.c.b16 %v556, %v552
        %v681 = vpack.c.b16 %v561, %v557
        %v682 = vpack.c.b16 %v562, %v558
        %v683 = vpack.c.b16 %v563, %v559
        %v684 = vpack.c.b16 %v564, %v560
        %v685 = vpack.c.b16 %v569, %v565
        %v686 = vpack.c.b16 %v570, %v566
        %v687 = vpack.c.b16 %v571, %v567
        %v688 = vpack.c.b16 %v572, %v568
        %v689 = vpack.c.b16 %v577, %v573
        %v690 = vpack.c.b16 %v578, %v574
        %v691 = vpack.c.b16 %v579, %v575
        %v692 = vpack.c.b16 %v580, %v576
        %v693 = vpack.c.b16 %v585, %v581
        %v694 = vpack.c.b16 %v586, %v582
        %v695 = vpack.c.b16 %v587, %v583
        %v696 = vpack.c.b16 %v588, %v584
        %v697 = vpack.c.b16 %v593, %v589
        %v698 = vpack.c.b16 %v594, %v590
        %v699 = vpack.c.b16 %v595, %v591
        %v700 = vpack.c.b16 %v596, %v592
        %v701 = vpack.c.b16 %v601, %v597
        %v702 = vpack.c.b16 %v602, %v598
        %v703 = vpack.c.b16 %v603, %v599
        %v704 = vpack.c.b16 %v604, %v600
        %v705 = vpack.c.b16 %v609, %v605
        %v706 = vpack.c.b16 %v610, %v606
        %v707 = vpack.c.b16 %v611, %v607
        %v708 = vpack.c.b16 %v612, %v608
        %v709 = vpack.c.b16 %v617, %v613
        %v710 = vpack.c.b16 %v618, %v614
        %v711 = vpack.c.b16 %v619, %v615
        %v712 = vpack.c.b16 %v620, %v616
        %v713 = vpack.c.b16 %v625, %v621
        %v714 = vpack.c.b16 %v626, %v622
        %v715 = vpack.c.b16 %v627, %v623
        %v716 = vpack.c.b16 %v628, %v624
        %v717 = vpack.c.b16 %v633, %v629
        %v718 = vpack.c.b16 %v634, %v630
        %v719 = vpack.c.b16 %v635, %v631
        %v720 = vpack.c.b16 %v636, %v632
        %v721 = vpack.c.b16 %v641, %v637
        %v722 = vpack.c.b16 %v642, %v638
        %v723 = vpack.c.b16 %v643, %v639
        %v724 = vpack.c.b16 %v644, %v640
        %v725 = vpack.c.b16 %v649, %v645
        %v726 = vpack.c.b16 %v650, %v646
        %v727 = vpack.c.b16 %v651, %v647
        %v728 = vpack.c.b16 %v652, %v648
        %v729 = vpack.c.b16 %v657, %v653
        %v730 = vpack.c.b16 %v658, %v654
        %v731 = vpack.c.b16 %v659, %v655
        %v732 = vpack.c.b16 %v660, %v656
        %v733 = vpack.c.b16 %v665, %v661
        %v734 = vpack.c.b16 %v666, %v662
        %v735 = vpack.c.b16 %v667, %v663
        %v736 = vpack.c.b16 %v668, %v664
        %v737 = vpack.c.b16 %v673, %v669
        %v738 = vpack.c.b16 %v674, %v670
        %v739 = vpack.c.b16 %v675, %v671
        %v740 = vpack.c.b16 %v676, %v672
        %805 = vmatpush.bf16.msra.mxu0 %v705
        %806 = vmatpush.bf16.msra.mxu0 %v701
        %807 = vmatpush.bf16.msra.mxu0 %v697
        %808 = vmatpush.bf16.msra.mxu0 %v693
        %809 = vmatpush.bf16.msra.mxu0 %v689
        %810 = vmatpush.bf16.msra.mxu0 %v685
        %811 = vmatpush.bf16.msra.mxu0 %v681
        %812 = vmatpush.bf16.msra.mxu0 %v677
        %813 = vmatmul.bf16.gmra.mxu0 %v409
        %v814 = vpop.f32.mrf.mxu0
        %v815 = vadd.f32 %v477, %v814
        %v816 = vpop.f32.mrf.mxu0
        %v817 = vadd.f32 %v477, %v816
        %818 = vdwg.mxu0
        %819 = vmatpush.bf16.msra.mxu0 %v737
        %820 = vmatpush.bf16.msra.mxu0 %v733
        %821 = vmatpush.bf16.msra.mxu0 %v729
        %822 = vmatpush.bf16.msra.mxu0 %v725
        %823 = vmatpush.bf16.msra.mxu0 %v721
        %824 = vmatpush.bf16.msra.mxu0 %v717
        %825 = vmatpush.bf16.msra.mxu0 %v713
        %826 = vmatpush.bf16.msra.mxu0 %v709
        %827 = vmatmul.bf16.gmra.mxu0 %v410
        %v828 = vpop.f32.mrf.mxu0
        %v829 = vadd.f32 %v815, %v828
        %v830 = vpop.f32.mrf.mxu0
        %v831 = vadd.f32 %v817, %v830
        %832 = vdwg.mxu0
        %833 = vmatpush.bf16.msra.mxu0 %v706
        %834 = vmatpush.bf16.msra.mxu0 %v702
        %835 = vmatpush.bf16.msra.mxu0 %v698
        %836 = vmatpush.bf16.msra.mxu0 %v694
        %837 = vmatpush.bf16.msra.mxu0 %v690
        %838 = vmatpush.bf16.msra.mxu0 %v686
        %839 = vmatpush.bf16.msra.mxu0 %v682
        %840 = vmatpush.bf16.msra.mxu0 %v678
        %841 = vmatmul.bf16.gmra.mxu0 %v409
        %v842 = vpop.f32.mrf.mxu0
        %v843 = vadd.f32 %v478, %v842
        %v844 = vpop.f32.mrf.mxu0
        %v845 = vadd.f32 %v478, %v844
        %846 = vdwg.mxu0
        %847 = vmatpush.bf16.msra.mxu0 %v738
        %848 = vmatpush.bf16.msra.mxu0 %v734
        %849 = vmatpush.bf16.msra.mxu0 %v730
        %850 = vmatpush.bf16.msra.mxu0 %v726
        %851 = vmatpush.bf16.msra.mxu0 %v722
        %852 = vmatpush.bf16.msra.mxu0 %v718
        %853 = vmatpush.bf16.msra.mxu0 %v714
        %854 = vmatpush.bf16.msra.mxu0 %v710
        %855 = vmatmul.bf16.gmra.mxu0 %v410
        %v856 = vpop.f32.mrf.mxu0
        %v857 = vadd.f32 %v843, %v856
        %v858 = vpop.f32.mrf.mxu0
        %v859 = vadd.f32 %v845, %v858
        %860 = vdwg.mxu0
        %861 = vmatpush.bf16.msra.mxu0 %v707
        %862 = vmatpush.bf16.msra.mxu0 %v703
        %863 = vmatpush.bf16.msra.mxu0 %v699
        %864 = vmatpush.bf16.msra.mxu0 %v695
        %865 = vmatpush.bf16.msra.mxu0 %v691
        %866 = vmatpush.bf16.msra.mxu0 %v687
        %867 = vmatpush.bf16.msra.mxu0 %v683
        %868 = vmatpush.bf16.msra.mxu0 %v679
        %869 = vmatmul.bf16.gmra.mxu0 %v409
        %v870 = vpop.f32.mrf.mxu0
        %v871 = vadd.f32 %v479, %v870
        %v872 = vpop.f32.mrf.mxu0
        %v873 = vadd.f32 %v479, %v872
        %874 = vdwg.mxu0
        %875 = vmatpush.bf16.msra.mxu0 %v739
        %876 = vmatpush.bf16.msra.mxu0 %v735
        %877 = vmatpush.bf16.msra.mxu0 %v731
        %878 = vmatpush.bf16.msra.mxu0 %v727
        %879 = vmatpush.bf16.msra.mxu0 %v723
        %880 = vmatpush.bf16.msra.mxu0 %v719
        %881 = vmatpush.bf16.msra.mxu0 %v715
        %882 = vmatpush.bf16.msra.mxu0 %v711
        %883 = vmatmul.bf16.gmra.mxu0 %v410
        %v884 = vpop.f32.mrf.mxu0
        %v885 = vadd.f32 %v871, %v884
        %v886 = vpop.f32.mrf.mxu0
        %v887 = vadd.f32 %v873, %v886
        %888 = vdwg.mxu0
        %889 = vmatpush.bf16.msra.mxu0 %v708
        %890 = vmatpush.bf16.msra.mxu0 %v704
        %891 = vmatpush.bf16.msra.mxu0 %v700
        %892 = vmatpush.bf16.msra.mxu0 %v696
        %893 = vmatpush.bf16.msra.mxu0 %v692
        %894 = vmatpush.bf16.msra.mxu0 %v688
        %895 = vmatpush.bf16.msra.mxu0 %v684
        %896 = vmatpush.bf16.msra.mxu0 %v680
        %897 = vmatmul.bf16.gmra.mxu0 %v409
        %v898 = vpop.f32.mrf.mxu0
        %v899 = vadd.f32 %v480, %v898
        %v900 = vpop.f32.mrf.mxu0
        %v901 = vadd.f32 %v480, %v900
        %902 = vdwg.mxu0
        %903 = vmatpush.bf16.msra.mxu0 %v740
        %904 = vmatpush.bf16.msra.mxu0 %v736
        %905 = vmatpush.bf16.msra.mxu0 %v732
        %906 = vmatpush.bf16.msra.mxu0 %v728
        %907 = vmatpush.bf16.msra.mxu0 %v724
        %908 = vmatpush.bf16.msra.mxu0 %v720
        %909 = vmatpush.bf16.msra.mxu0 %v716
        %910 = vmatpush.bf16.msra.mxu0 %v712
        %911 = vmatmul.bf16.gmra.mxu0 %v410
        %v912 = vpop.f32.mrf.mxu0
        %v913 = vadd.f32 %v899, %v912
        %v914 = vpop.f32.mrf.mxu0
        %v915 = vadd.f32 %v901, %v914
        %916 = vdwg.mxu0
        %v917 = vmul.f32 %v829, %v829
        %v918 = vmul.f32 %v857, %v857
        %v919 = vmul.f32 %v885, %v885
        %v920 = vmul.f32 %v913, %v913
        %v921 = vmul.f32 %v831, %v831
        %v922 = vmul.f32 %v859, %v859
        %v923 = vmul.f32 %v887, %v887
        %v924 = vmul.f32 %v915, %v915
        %v925 = vmul.f32 %v917, %v829
        %v926 = vmul.f32 %v918, %v857
        %v927 = vmul.f32 %v919, %v885
        %v928 = vmul.f32 %v920, %v913
        %v929 = vmul.f32 %v921, %v831
        %v930 = vmul.f32 %v922, %v859
        %v931 = vmul.f32 %v923, %v887
        %v932 = vmul.f32 %v924, %v915
        %v933 = vmul.f32 %v925, 0.044715
        %v934 = vmul.f32 %v926, 0.044715
        %v935 = vmul.f32 %v927, 0.044715
        %v936 = vmul.f32 %v928, 0.044715
        %v937 = vmul.f32 %v929, 0.044715
        %v938 = vmul.f32 %v930, 0.044715
        %v939 = vmul.f32 %v931, 0.044715
        %v940 = vmul.f32 %v932, 0.044715
        %v941 = vadd.f32 %v829, %v933
        %v942 = vadd.f32 %v857, %v934
        %v943 = vadd.f32 %v885, %v935
        %v944 = vadd.f32 %v913, %v936
        %v945 = vadd.f32 %v831, %v937
        %v946 = vadd.f32 %v859, %v938
        %v947 = vadd.f32 %v887, %v939
        %v948 = vadd.f32 %v915, %v940
        %v949 = vmul.f32 %v941, 0.7978846
        %v950 = vmul.f32 %v942, 0.7978846
        %v951 = vmul.f32 %v943, 0.7978846
        %v952 = vmul.f32 %v944, 0.7978846
        %v953 = vmul.f32 %v945, 0.7978846
        %v954 = vmul.f32 %v946, 0.7978846
        %v955 = vmul.f32 %v947, 0.7978846
        %v956 = vmul.f32 %v948, 0.7978846
        %v957 = vmul.f32 %v829, 0.5
        %v958 = vmul.f32 %v857, 0.5
        %v959 = vmul.f32 %v885, 0.5
        %v960 = vmul.f32 %v913, 0.5
        %v961 = vmul.f32 %v831, 0.5
        %v962 = vmul.f32 %v859, 0.5
        %v963 = vmul.f32 %v887, 0.5
        %v964 = vmul.f32 %v915, 0.5
        %v965 = vtanh.pop %v949
        %v966 = vtanh.pop %v950
        %v967 = vtanh.pop %v951
        %v968 = vtanh.pop %v952
        %v969 = vtanh.pop %v953
        %v970 = vtanh.pop %v954
        %v971 = vtanh.pop %v955
        %v972 = vtanh.pop %v956
        %v973 = vadd.f32 %v965, 1.0
        %v974 = vadd.f32 %v966, 1.0
        %v975 = vadd.f32 %v967, 1.0
        %v976 = vadd.f32 %v968, 1.0
        %v977 = vadd.f32 %v969, 1.0
        %v978 = vadd.f32 %v970, 1.0
        %v979 = vadd.f32 %v971, 1.0
        %v980 = vadd.f32 %v972, 1.0
        %v981 = vmul.f32 %v957, %v973
        %v982 = vmul.f32 %v958, %v974
        %v983 = vmul.f32 %v959, %v975
        %v984 = vmul.f32 %v960, %v976
        %v985 = vmul.f32 %v961, %v977
        %v986 = vmul.f32 %v962, %v978
        %v987 = vmul.f32 %v963, %v979
        %v988 = vmul.f32 %v964, %v980
        %v989 = vpack.c.bf16 %v985, %v981
        %v990 = vpack.c.bf16 %v986, %v982
        %v991 = vpack.c.bf16 %v987, %v983
        %v992 = vpack.c.bf16 %v988, %v984
        %v993 = vld [vmem:[#allocation7] sm:$0xff]
        %v994 = vld [vmem:[#allocation7 + $0x8] sm:$0xff]
        %v995 = vld [vmem:[#allocation7 + $0x10] sm:$0xff]
        %v996 = vld [vmem:[#allocation7 + $0x18] sm:$0xff]
        %v997 = vld [vmem:[#allocation7 + $0x20] sm:$0xff]
        %v998 = vld [vmem:[#allocation7 + $0x28] sm:$0xff]
        %v999 = vld [vmem:[#allocation7 + $0x30] sm:$0xff]
        %v1000 = vld [vmem:[#allocation7 + $0x38] sm:$0xff]
        %v1001 = vld [vmem:[#allocation7 + $0x40] sm:$0xff]
        %v1002 = vld [vmem:[#allocation7 + $0x48] sm:$0xff]
        %v1003 = vld [vmem:[#allocation7 + $0x50] sm:$0xff]
        %v1004 = vld [vmem:[#allocation7 + $0x58] sm:$0xff]
        %v1005 = vld [vmem:[#allocation7 + $0x60] sm:$0xff]
        %v1006 = vld [vmem:[#allocation7 + $0x68] sm:$0xff]
        %v1007 = vld [vmem:[#allocation7 + $0x70] sm:$0xff]
        %v1008 = vld [vmem:[#allocation7 + $0x78] sm:$0xff]
        %v1009 = vld [vmem:[#allocation7 + $0x80] sm:$0xff]
        %v1010 = vld [vmem:[#allocation7 + $0x88] sm:$0xff]
        %v1011 = vld [vmem:[#allocation7 + $0x90] sm:$0xff]
        %v1012 = vld [vmem:[#allocation7 + $0x98] sm:$0xff]
        %v1013 = vld [vmem:[#allocation7 + $0xa0] sm:$0xff]
        %v1014 = vld [vmem:[#allocation7 + $0xa8] sm:$0xff]
        %v1015 = vld [vmem:[#allocation7 + $0xb0] sm:$0xff]
        %v1016 = vld [vmem:[#allocation7 + $0xb8] sm:$0xff]
        %v1017 = vld [vmem:[#allocation7 + $0xc0] sm:$0xff]
        %v1018 = vld [vmem:[#allocation7 + $0xc8] sm:$0xff]
        %v1019 = vld [vmem:[#allocation7 + $0xd0] sm:$0xff]
        %v1020 = vld [vmem:[#allocation7 + $0xd8] sm:$0xff]
        %v1021 = vld [vmem:[#allocation7 + $0xe0] sm:$0xff]
        %v1022 = vld [vmem:[#allocation7 + $0xe8] sm:$0xff]
        %v1023 = vld [vmem:[#allocation7 + $0xf0] sm:$0xff]
        %v1024 = vld [vmem:[#allocation7 + $0xf8] sm:$0xff]
        %v1025 = vld [vmem:[#allocation7 + $0x100] sm:$0xff]
        %v1026 = vld [vmem:[#allocation7 + $0x108] sm:$0xff]
        %v1027 = vld [vmem:[#allocation7 + $0x110] sm:$0xff]
        %v1028 = vld [vmem:[#allocation7 + $0x118] sm:$0xff]
        %v1029 = vld [vmem:[#allocation7 + $0x120] sm:$0xff]
        %v1030 = vld [vmem:[#allocation7 + $0x128] sm:$0xff]
        %v1031 = vld [vmem:[#allocation7 + $0x130] sm:$0xff]
        %v1032 = vld [vmem:[#allocation7 + $0x138] sm:$0xff]
        %v1033 = vld [vmem:[#allocation7 + $0x140] sm:$0xff]
        %v1034 = vld [vmem:[#allocation7 + $0x148] sm:$0xff]
        %v1035 = vld [vmem:[#allocation7 + $0x150] sm:$0xff]
        %v1036 = vld [vmem:[#allocation7 + $0x158] sm:$0xff]
        %v1037 = vld [vmem:[#allocation7 + $0x160] sm:$0xff]
        %v1038 = vld [vmem:[#allocation7 + $0x168] sm:$0xff]
        %v1039 = vld [vmem:[#allocation7 + $0x170] sm:$0xff]
        %v1040 = vld [vmem:[#allocation7 + $0x178] sm:$0xff]
        %v1041 = vld [vmem:[#allocation7 + $0x180] sm:$0xff]
        %v1042 = vld [vmem:[#allocation7 + $0x188] sm:$0xff]
        %v1043 = vld [vmem:[#allocation7 + $0x190] sm:$0xff]
        %v1044 = vld [vmem:[#allocation7 + $0x198] sm:$0xff]
        %v1045 = vld [vmem:[#allocation7 + $0x1a0] sm:$0xff]
        %v1046 = vld [vmem:[#allocation7 + $0x1a8] sm:$0xff]
        %v1047 = vld [vmem:[#allocation7 + $0x1b0] sm:$0xff]
        %v1048 = vld [vmem:[#allocation7 + $0x1b8] sm:$0xff]
        %v1049 = vld [vmem:[#allocation7 + $0x1c0] sm:$0xff]
        %v1050 = vld [vmem:[#allocation7 + $0x1c8] sm:$0xff]
        %v1051 = vld [vmem:[#allocation7 + $0x1d0] sm:$0xff]
        %v1052 = vld [vmem:[#allocation7 + $0x1d8] sm:$0xff]
        %v1053 = vld [vmem:[#allocation7 + $0x1e0] sm:$0xff]
        %v1054 = vld [vmem:[#allocation7 + $0x1e8] sm:$0xff]
        %v1055 = vld [vmem:[#allocation7 + $0x1f0] sm:$0xff]
        %v1056 = vld [vmem:[#allocation7 + $0x1f8] sm:$0xff]
        %v1057 = vld [vmem:[%s4] sm:$0x3]
        %v1059 = vperm.slane %v1057, 0
        %v1060 = vperm.slane %v1057, 1
        %v1127 = vunpack.c.l.b16 %v993
        %v1128 = vunpack.c.h.b16 %v993
        %v1129 = vunpack.c.l.b16 %v994
        %v1130 = vunpack.c.h.b16 %v994
        %v1131 = vunpack.c.l.b16 %v995
        %v1132 = vunpack.c.h.b16 %v995
        %v1133 = vunpack.c.l.b16 %v996
        %v1134 = vunpack.c.h.b16 %v996
        %v1135 = vunpack.c.l.b16 %v997
        %v1136 = vunpack.c.h.b16 %v997
        %v1137 = vunpack.c.l.b16 %v998
        %v1138 = vunpack.c.h.b16 %v998
        %v1139 = vunpack.c.l.b16 %v999
        %v1140 = vunpack.c.h.b16 %v999
        %v1141 = vunpack.c.l.b16 %v1000
        %v1142 = vunpack.c.h.b16 %v1000
        %v1143 = vunpack.c.l.b16 %v1001
        %v1144 = vunpack.c.h.b16 %v1001
        %v1145 = vunpack.c.l.b16 %v1002
        %v1146 = vunpack.c.h.b16 %v1002
        %v1147 = vunpack.c.l.b16 %v1003
        %v1148 = vunpack.c.h.b16 %v1003
        %v1149 = vunpack.c.l.b16 %v1004
        %v1150 = vunpack.c.h.b16 %v1004
        %v1151 = vunpack.c.l.b16 %v1005
        %v1152 = vunpack.c.h.b16 %v1005
        %v1153 = vunpack.c.l.b16 %v1006
        %v1154 = vunpack.c.h.b16 %v1006
        %v1155 = vunpack.c.l.b16 %v1007
        %v1156 = vunpack.c.h.b16 %v1007
        %v1157 = vunpack.c.l.b16 %v1008
        %v1158 = vunpack.c.h.b16 %v1008
        %v1159 = vunpack.c.l.b16 %v1009
        %v1160 = vunpack.c.h.b16 %v1009
        %v1161 = vunpack.c.l.b16 %v1010
        %v1162 = vunpack.c.h.b16 %v1010
        %v1163 = vunpack.c.l.b16 %v1011
        %v1164 = vunpack.c.h.b16 %v1011
        %v1165 = vunpack.c.l.b16 %v1012
        %v1166 = vunpack.c.h.b16 %v1012
        %v1167 = vunpack.c.l.b16 %v1013
        %v1168 = vunpack.c.h.b16 %v1013
        %v1169 = vunpack.c.l.b16 %v1014
        %v1170 = vunpack.c.h.b16 %v1014
        %v1171 = vunpack.c.l.b16 %v1015
        %v1172 = vunpack.c.h.b16 %v1015
        %v1173 = vunpack.c.l.b16 %v1016
        %v1174 = vunpack.c.h.b16 %v1016
        %v1175 = vunpack.c.l.b16 %v1017
        %v1176 = vunpack.c.h.b16 %v1017
        %v1177 = vunpack.c.l.b16 %v1018
        %v1178 = vunpack.c.h.b16 %v1018
        %v1179 = vunpack.c.l.b16 %v1019
        %v1180 = vunpack.c.h.b16 %v1019
        %v1181 = vunpack.c.l.b16 %v1020
        %v1182 = vunpack.c.h.b16 %v1020
        %v1183 = vunpack.c.l.b16 %v1021
        %v1184 = vunpack.c.h.b16 %v1021
        %v1185 = vunpack.c.l.b16 %v1022
        %v1186 = vunpack.c.h.b16 %v1022
        %v1187 = vunpack.c.l.b16 %v1023
        %v1188 = vunpack.c.h.b16 %v1023
        %v1189 = vunpack.c.l.b16 %v1024
        %v1190 = vunpack.c.h.b16 %v1024
        %v1191 = vunpack.c.l.b16 %v1025
        %v1192 = vunpack.c.h.b16 %v1025
        %v1193 = vunpack.c.l.b16 %v1026
        %v1194 = vunpack.c.h.b16 %v1026
        %v1195 = vunpack.c.l.b16 %v1027
        %v1196 = vunpack.c.h.b16 %v1027
        %v1197 = vunpack.c.l.b16 %v1028
        %v1198 = vunpack.c.h.b16 %v1028
        %v1199 = vunpack.c.l.b16 %v1029
        %v1200 = vunpack.c.h.b16 %v1029
        %v1201 = vunpack.c.l.b16 %v1030
        %v1202 = vunpack.c.h.b16 %v1030
        %v1203 = vunpack.c.l.b16 %v1031
        %v1204 = vunpack.c.h.b16 %v1031
        %v1205 = vunpack.c.l.b16 %v1032
        %v1206 = vunpack.c.h.b16 %v1032
        %v1207 = vunpack.c.l.b16 %v1033
        %v1208 = vunpack.c.h.b16 %v1033
        %v1209 = vunpack.c.l.b16 %v1034
        %v1210 = vunpack.c.h.b16 %v1034
        %v1211 = vunpack.c.l.b16 %v1035
        %v1212 = vunpack.c.h.b16 %v1035
        %v1213 = vunpack.c.l.b16 %v1036
        %v1214 = vunpack.c.h.b16 %v1036
        %v1215 = vunpack.c.l.b16 %v1037
        %v1216 = vunpack.c.h.b16 %v1037
        %v1217 = vunpack.c.l.b16 %v1038
        %v1218 = vunpack.c.h.b16 %v1038
        %v1219 = vunpack.c.l.b16 %v1039
        %v1220 = vunpack.c.h.b16 %v1039
        %v1221 = vunpack.c.l.b16 %v1040
        %v1222 = vunpack.c.h.b16 %v1040
        %v1223 = vunpack.c.l.b16 %v1041
        %v1224 = vunpack.c.h.b16 %v1041
        %v1225 = vunpack.c.l.b16 %v1042
        %v1226 = vunpack.c.h.b16 %v1042
        %v1227 = vunpack.c.l.b16 %v1043
        %v1228 = vunpack.c.h.b16 %v1043
        %v1229 = vunpack.c.l.b16 %v1044
        %v1230 = vunpack.c.h.b16 %v1044
        %v1231 = vunpack.c.l.b16 %v1045
        %v1232 = vunpack.c.h.b16 %v1045
        %v1233 = vunpack.c.l.b16 %v1046
        %v1234 = vunpack.c.h.b16 %v1046
        %v1235 = vunpack.c.l.b16 %v1047
        %v1236 = vunpack.c.h.b16 %v1047
        %v1237 = vunpack.c.l.b16 %v1048
        %v1238 = vunpack.c.h.b16 %v1048
        %v1239 = vunpack.c.l.b16 %v1049
        %v1240 = vunpack.c.h.b16 %v1049
        %v1241 = vunpack.c.l.b16 %v1050
        %v1242 = vunpack.c.h.b16 %v1050
        %v1243 = vunpack.c.l.b16 %v1051
        %v1244 = vunpack.c.h.b16 %v1051
        %v1245 = vunpack.c.l.b16 %v1052
        %v1246 = vunpack.c.h.b16 %v1052
        %v1247 = vunpack.c.l.b16 %v1053
        %v1248 = vunpack.c.h.b16 %v1053
        %v1249 = vunpack.c.l.b16 %v1054
        %v1250 = vunpack.c.h.b16 %v1054
        %v1251 = vunpack.c.l.b16 %v1055
        %v1252 = vunpack.c.h.b16 %v1055
        %v1253 = vunpack.c.l.b16 %v1056
        %v1254 = vunpack.c.h.b16 %v1056
        %v1255 = vpack.c.b16 %v1129, %v1127
        %v1256 = vpack.c.b16 %v1130, %v1128
        %v1257 = vpack.c.b16 %v1133, %v1131
        %v1258 = vpack.c.b16 %v1134, %v1132
        %v1259 = vpack.c.b16 %v1137, %v1135
        %v1260 = vpack.c.b16 %v1138, %v1136
        %v1261 = vpack.c.b16 %v1141, %v1139
        %v1262 = vpack.c.b16 %v1142, %v1140
        %v1263 = vpack.c.b16 %v1145, %v1143
        %v1264 = vpack.c.b16 %v1146, %v1144
        %v1265 = vpack.c.b16 %v1149, %v1147
        %v1266 = vpack.c.b16 %v1150, %v1148
        %v1267 = vpack.c.b16 %v1153, %v1151
        %v1268 = vpack.c.b16 %v1154, %v1152
        %v1269 = vpack.c.b16 %v1157, %v1155
        %v1270 = vpack.c.b16 %v1158, %v1156
        %v1271 = vpack.c.b16 %v1161, %v1159
        %v1272 = vpack.c.b16 %v1162, %v1160
        %v1273 = vpack.c.b16 %v1165, %v1163
        %v1274 = vpack.c.b16 %v1166, %v1164
        %v1275 = vpack.c.b16 %v1169, %v1167
        %v1276 = vpack.c.b16 %v1170, %v1168
        %v1277 = vpack.c.b16 %v1173, %v1171
        %v1278 = vpack.c.b16 %v1174, %v1172
        %v1279 = vpack.c.b16 %v1177, %v1175
        %v1280 = vpack.c.b16 %v1178, %v1176
        %v1281 = vpack.c.b16 %v1181, %v1179
        %v1282 = vpack.c.b16 %v1182, %v1180
        %v1283 = vpack.c.b16 %v1185, %v1183
        %v1284 = vpack.c.b16 %v1186, %v1184
        %v1285 = vpack.c.b16 %v1189, %v1187
        %v1286 = vpack.c.b16 %v1190, %v1188
        %v1287 = vpack.c.b16 %v1193, %v1191
        %v1288 = vpack.c.b16 %v1194, %v1192
        %v1289 = vpack.c.b16 %v1197, %v1195
        %v1290 = vpack.c.b16 %v1198, %v1196
        %v1291 = vpack.c.b16 %v1201, %v1199
        %v1292 = vpack.c.b16 %v1202, %v1200
        %v1293 = vpack.c.b16 %v1205, %v1203
        %v1294 = vpack.c.b16 %v1206, %v1204
        %v1295 = vpack.c.b16 %v1209, %v1207
        %v1296 = vpack.c.b16 %v1210, %v1208
        %v1297 = vpack.c.b16 %v1213, %v1211
        %v1298 = vpack.c.b16 %v1214, %v1212
        %v1299 = vpack.c.b16 %v1217, %v1215
        %v1300 = vpack.c.b16 %v1218, %v1216
        %v1301 = vpack.c.b16 %v1221, %v1219
        %v1302 = vpack.c.b16 %v1222, %v1220
        %v1303 = vpack.c.b16 %v1225, %v1223
        %v1304 = vpack.c.b16 %v1226, %v1224
        %v1305 = vpack.c.b16 %v1229, %v1227
        %v1306 = vpack.c.b16 %v1230, %v1228
        %v1307 = vpack.c.b16 %v1233, %v1231
        %v1308 = vpack.c.b16 %v1234, %v1232
        %v1309 = vpack.c.b16 %v1237, %v1235
        %v1310 = vpack.c.b16 %v1238, %v1236
        %v1311 = vpack.c.b16 %v1241, %v1239
        %v1312 = vpack.c.b16 %v1242, %v1240
        %v1313 = vpack.c.b16 %v1245, %v1243
        %v1314 = vpack.c.b16 %v1246, %v1244
        %v1315 = vpack.c.b16 %v1249, %v1247
        %v1316 = vpack.c.b16 %v1250, %v1248
        %v1317 = vpack.c.b16 %v1253, %v1251
        %v1318 = vpack.c.b16 %v1254, %v1252
        %1383 = vmatpush.bf16.msra.mxu0 %v1269
        %1384 = vmatpush.bf16.msra.mxu0 %v1267
        %1385 = vmatpush.bf16.msra.mxu0 %v1265
        %1386 = vmatpush.bf16.msra.mxu0 %v1263
        %1387 = vmatpush.bf16.msra.mxu0 %v1261
        %1388 = vmatpush.bf16.msra.mxu0 %v1259
        %1389 = vmatpush.bf16.msra.mxu0 %v1257
        %1390 = vmatpush.bf16.msra.mxu0 %v1255
        %1391 = vmatmul.bf16.gmra.mxu0 %v989
        %v1392 = vpop.f32.mrf.mxu0
        %v1393 = vadd.f32 %v1059, %v1392
        %v1394 = vpop.f32.mrf.mxu0
        %v1395 = vadd.f32 %v1059, %v1394
        %1396 = vdwg.mxu0
        %1397 = vmatpush.bf16.msra.mxu0 %v1285
        %1398 = vmatpush.bf16.msra.mxu0 %v1283
        %1399 = vmatpush.bf16.msra.mxu0 %v1281
        %1400 = vmatpush.bf16.msra.mxu0 %v1279
        %1401 = vmatpush.bf16.msra.mxu0 %v1277
        %1402 = vmatpush.bf16.msra.mxu0 %v1275
        %1403 = vmatpush.bf16.msra.mxu0 %v1273
        %1404 = vmatpush.bf16.msra.mxu0 %v1271
        %1405 = vmatmul.bf16.gmra.mxu0 %v990
        %v1406 = vpop.f32.mrf.mxu0
        %v1407 = vadd.f32 %v1393, %v1406
        %v1408 = vpop.f32.mrf.mxu0
        %v1409 = vadd.f32 %v1395, %v1408
        %1410 = vdwg.mxu0
        %1411 = vmatpush.bf16.msra.mxu0 %v1301
        %1412 = vmatpush.bf16.msra.mxu0 %v1299
        %1413 = vmatpush.bf16.msra.mxu0 %v1297
        %1414 = vmatpush.bf16.msra.mxu0 %v1295
        %1415 = vmatpush.bf16.msra.mxu0 %v1293
        %1416 = vmatpush.bf16.msra.mxu0 %v1291
        %1417 = vmatpush.bf16.msra.mxu0 %v1289
        %1418 = vmatpush.bf16.msra.mxu0 %v1287
        %1419 = vmatmul.bf16.gmra.mxu0 %v991
        %v1420 = vpop.f32.mrf.mxu0
        %v1421 = vadd.f32 %v1407, %v1420
        %v1422 = vpop.f32.mrf.mxu0
        %v1423 = vadd.f32 %v1409, %v1422
        %1424 = vdwg.mxu0
        %1425 = vmatpush.bf16.msra.mxu0 %v1317
        %1426 = vmatpush.bf16.msra.mxu0 %v1315
        %1427 = vmatpush.bf16.msra.mxu0 %v1313
        %1428 = vmatpush.bf16.msra.mxu0 %v1311
        %1429 = vmatpush.bf16.msra.mxu0 %v1309
        %1430 = vmatpush.bf16.msra.mxu0 %v1307
        %1431 = vmatpush.bf16.msra.mxu0 %v1305
        %1432 = vmatpush.bf16.msra.mxu0 %v1303
        %1433 = vmatmul.bf16.gmra.mxu0 %v992
        %v1434 = vpop.f32.mrf.mxu0
        %v1435 = vadd.f32 %v1421, %v1434
        %v1436 = vpop.f32.mrf.mxu0
        %v1437 = vadd.f32 %v1423, %v1436
        %1438 = vdwg.mxu0
        %1439 = vmatpush.bf16.msra.mxu0 %v1270
        %1440 = vmatpush.bf16.msra.mxu0 %v1268
        %1441 = vmatpush.bf16.msra.mxu0 %v1266
        %1442 = vmatpush.bf16.msra.mxu0 %v1264
        %1443 = vmatpush.bf16.msra.mxu0 %v1262
        %1444 = vmatpush.bf16.msra.mxu0 %v1260
        %1445 = vmatpush.bf16.msra.mxu0 %v1258
        %1446 = vmatpush.bf16.msra.mxu0 %v1256
        %1447 = vmatmul.bf16.gmra.mxu0 %v989
        %v1448 = vpop.f32.mrf.mxu0
        %v1449 = vadd.f32 %v1060, %v1448
        %v1450 = vpop.f32.mrf.mxu0
        %v1451 = vadd.f32 %v1060, %v1450
        %1452 = vdwg.mxu0
        %1453 = vmatpush.bf16.msra.mxu0 %v1286
        %1454 = vmatpush.bf16.msra.mxu0 %v1284
        %1455 = vmatpush.bf16.msra.mxu0 %v1282
        %1456 = vmatpush.bf16.msra.mxu0 %v1280
        %1457 = vmatpush.bf16.msra.mxu0 %v1278
        %1458 = vmatpush.bf16.msra.mxu0 %v1276
        %1459 = vmatpush.bf16.msra.mxu0 %v1274
        %1460 = vmatpush.bf16.msra.mxu0 %v1272
        %1461 = vmatmul.bf16.gmra.mxu0 %v990
        %v1462 = vpop.f32.mrf.mxu0
        %v1463 = vadd.f32 %v1449, %v1462
        %v1464 = vpop.f32.mrf.mxu0
        %v1465 = vadd.f32 %v1451, %v1464
        %1466 = vdwg.mxu0
        %1467 = vmatpush.bf16.msra.mxu0 %v1302
        %1468 = vmatpush.bf16.msra.mxu0 %v1300
        %1469 = vmatpush.bf16.msra.mxu0 %v1298
        %1470 = vmatpush.bf16.msra.mxu0 %v1296
        %1471 = vmatpush.bf16.msra.mxu0 %v1294
        %1472 = vmatpush.bf16.msra.mxu0 %v1292
        %1473 = vmatpush.bf16.msra.mxu0 %v1290
        %1474 = vmatpush.bf16.msra.mxu0 %v1288
        %1475 = vmatmul.bf16.gmra.mxu0 %v991
        %v1476 = vpop.f32.mrf.mxu0
        %v1477 = vadd.f32 %v1463, %v1476
        %v1478 = vpop.f32.mrf.mxu0
        %v1479 = vadd.f32 %v1465, %v1478
        %1480 = vdwg.mxu0
        %1481 = vmatpush.bf16.msra.mxu0 %v1318
        %1482 = vmatpush.bf16.msra.mxu0 %v1316
        %1483 = vmatpush.bf16.msra.mxu0 %v1314
        %1484 = vmatpush.bf16.msra.mxu0 %v1312
        %1485 = vmatpush.bf16.msra.mxu0 %v1310
        %1486 = vmatpush.bf16.msra.mxu0 %v1308
        %1487 = vmatpush.bf16.msra.mxu0 %v1306
        %1488 = vmatpush.bf16.msra.mxu0 %v1304
        %1489 = vmatmul.bf16.gmra.mxu0 %v992
        %v1490 = vpop.f32.mrf.mxu0
        %v1491 = vadd.f32 %v1477, %v1490
        %v1492 = vpop.f32.mrf.mxu0
        %v1493 = vadd.f32 %v1479, %v1492
        %1494 = vdwg.mxu0
        %1495 = vst [vmem:[%s294] sm:$0xff] %v1435
        %1496 = vst [vmem:[%s294 + $0x8] sm:$0xff] %v1491
        %1497 = vst [vmem:[%s294 + $0x10] sm:$0xf] %v1437
        %1498 = vst [vmem:[%s294 + $0x18] sm:$0xf] %v1493
        %p1499 = scmp.lt.s32.totalorder %s21, 1
        %s1500 = scalar_select %p1499, %s21, 1
        %s1501 = smul.addr %s1500, 4
        %s1502 = smul.addr %s1501, 8
        %s1503 = scalar_lea.vmem %s5, %s1502
        // Predicated region
        $region57: #{tpu_custom_call.1} parent=39 // pred_check
          %p1504 = pneg %p149
        $region58: #{tpu_custom_call.1} parent=39 // pred_check_branch
          %1506 = sbr.rel (%p1504) target = $region60
        $region59: #{tpu_custom_call.1} parent=39 // pred_region
          _
        $region60: #{tpu_custom_call.1} parent=39 // pred_fallthru
          _
      $region40: #{tpu_custom_call.1} parent=5 // pred_fallthru
        _
      %p1507 = scmp.le.s32.totalorder 2, %s16
      // Predicated region
      $region61: #{tpu_custom_call.1} parent=5 // pred_check
        %p1508 = pneg %p1507
      $region62: #{tpu_custom_call.1} parent=5 // pred_check_branch
        %1510 = sbr.rel (%p1508) target = $region64
      $region63: #{tpu_custom_call.1} parent=5 // pred_region
        %s1511 = ssub.s32 %s16, 2
        // Predicated region
        $region65: #{tpu_custom_call.1} parent=63 // pred_check
          %p1512 = pneg %p155
        $region66: #{tpu_custom_call.1} parent=63 // pred_check_branch
          %1514 = sbr.rel (%p1512) target = $region68
        $region67: #{tpu_custom_call.1} parent=63 // pred_region
          %p1515 = scmp.lt.s32.totalorder %s22, 1
          %s1516 = scalar_select %p1515, %s22, 1
          %s1517 = smul.addr %s1516, 4
          %s1518 = smul.addr %s1517, 8
          %s1519 = scalar_lea.vmem %s5, %s1518
        $region68: #{tpu_custom_call.1} parent=63 // pred_fallthru
          _
      $region64: #{tpu_custom_call.1} parent=5 // pred_fallthru
        _
    $region6: #{tpu_custom_call.1} parent=1 // loop_footer
      %s20 = sadd.s32 1, %s16
    $region7: #{tpu_custom_call.1} parent=1 // loop_footer_branch
      %15 = sbr.rel target = $region3
    $region8: #{tpu_custom_call.1} parent=1 // loop_exit
      _
    %1520 = vsyncpa [#allocation3], 1
    %s1521 = scalar_lea.sflag [#allocation3], 1
    %1522 = vsyncpa %s1521, 1
    %1523 = vsyncpa [#allocation5], 1
    %1524 = vsyncpa [#allocation8], 1

</llo_original>
